<compile_context>
chip_gen: v7x
topology: tpu7x:2x2x1
jax: 0.10.0
libtpu: 0.0.40
codegen_flags: <defaults>
</compile_context>

<pallas_src>
import functools

import jax
import jax.numpy as jnp
from jax import lax
from jax.experimental import pallas as pl
from jax.experimental.pallas import tpu as pltpu

K = 10
ALPHA = 0.1
TILE_N = 128          # row tile (multiple of 8; bf16 adjacency needs multiple of 16)
C_PAD = 128           # lane-dense padded class dimension


def appnp_kernel(x_ref, adj_ref, w1_ref, b1_ref, w2_ref, b2_ref, o_ref,
                 z_a, z_b, ah_scr, *, tile_n, alpha):
    k = pl.program_id(0)                      # 0 = encoder, 1..K = PPR steps
    i = pl.program_id(1)                      # row tile
    n_steps = pl.num_programs(0)
    rows = pl.ds(pl.multiple_of(i * tile_n, tile_n), tile_n)

    # ---- step 0: encoder  h = relu(x @ W1 + b1) ------------------------------
    @pl.when(k == 0)
    def _encode():
        h = jnp.dot(x_ref[...], w1_ref[...],
                    preferred_element_type=jnp.float32) + b1_ref[...]
        h = jnp.maximum(h, 0.0)
        # F.dropout(p=0.5, training=False) is the identity in eval mode.
        # TODO(synk): training-mode dropout (random mask) not reproduced.
        z_a[rows, :] = h                      # z_0 = h
        ah_scr[rows, :] = alpha * h           # hoisted alpha * h (reused K times)

    # ---- steps 1..K: z_k = A_scaled @ z_{k-1} + alpha*h  (A_scaled = (1-a)*A_hat)
    def _step(z_src, z_dst):
        z_new = jnp.dot(adj_ref[...].astype(jnp.float32), z_src[...],
                        preferred_element_type=jnp.float32) + ah_scr[rows, :]
        z_dst[rows, :] = z_new

        # fused readout on the last propagation step: out = z_K @ W2 + b2
        @pl.when(k == n_steps - 1)
        def _readout():
            o_ref[...] = (jnp.dot(z_new, w2_ref[...],
                                  preferred_element_type=jnp.float32)
                          + b2_ref[...]).astype(o_ref.dtype)

    @pl.when(k % 2 == 1)                      # odd steps: read z_a, write z_b
    def _odd():
        _step(z_a, z_b)

    @pl.when((k > 0) & (k % 2 == 0))          # even steps >= 2: read z_b, write z_a
    def _even():
        _step(z_b, z_a)


def build_adj_hat(edge_index, num_nodes):
    """Dense GCN normalization: D^-1/2 (A + I) D^-1/2, PyG gcn_norm semantics.

    Duplicate edges are scatter-added (message passing sums them); existing
    self loops are collapsed to a single unit-weight loop and missing ones are
    added (add_remaining_self_loops behaviour).
    """
    src, dst = edge_index[0], edge_index[1]
    a = jnp.zeros((num_nodes, num_nodes), jnp.float32).at[dst, src].add(1.0)
    eye = jnp.eye(num_nodes, dtype=jnp.float32)
    a = a * (1.0 - eye) + eye
    deg = a.sum(axis=1)
    dinv = jnp.where(deg > 0, lax.rsqrt(deg), 0.0)
    return dinv[:, None] * a * dinv[None, :]


def appnp_net(x, adj_hat, w1, b1, w2, b2, *, k_steps=K, alpha=ALPHA,
              tile_n=TILE_N, c_pad=C_PAD):
    n, in_dim = x.shape
    hid = w1.shape[1]
    num_classes = w2.shape[1]
    assert k_steps >= 1
    assert n % tile_n == 0, "demo wrapper assumes N divisible by TILE_N"
    num_tiles = n // tile_n

    # Fold (1 - alpha) into the adjacency and drop it to bf16: the K*N^2 stream
    # is the HBM-bandwidth bottleneck, halving its bytes is the big lever.
    adj_prop = ((1.0 - alpha) * adj_hat).astype(jnp.bfloat16)

    # Lane-dense readout: pad W2 / b2 / out to 128 classes, slice afterwards.
    w2p = jnp.zeros((hid, c_pad), jnp.float32).at[:, :num_classes].set(w2)
    b2p = jnp.zeros((1, c_pad), jnp.float32).at[:, :num_classes].set(b2)

    flops = int(2 * n * in_dim * hid
                + 2 * k_steps * n * n * hid
                + 2 * n * hid * c_pad)
    bytes_accessed = int(n * in_dim * 4
                         + k_steps * n * n * 2           # bf16 adjacency, K passes
                         + (in_dim * hid + hid + hid * c_pad + c_pad) * 4
                         + n * c_pad * 4)

    kernel = functools.partial(appnp_kernel, tile_n=tile_n, alpha=alpha)

    out_padded = pl.pallas_call(
        kernel,
        out_shape=jax.ShapeDtypeStruct((n, c_pad), jnp.float32),
        grid_spec=pltpu.PrefetchScalarGridSpec(
            num_scalar_prefetch=0,
            grid=(k_steps + 1, num_tiles),
            in_specs=[
                # x: streamed per row tile during the encoder step, parked after.
                pl.BlockSpec((tile_n, in_dim),
                             lambda k, i: (jnp.where(k == 0, i, 0), 0)),
                # adjacency: streamed row tiles during propagation steps.
                pl.BlockSpec((tile_n, n),
                             lambda k, i: (jnp.where(k == 0, 0, i), 0)),
                # small weights/biases: resident (constant block index).
                pl.BlockSpec((in_dim, hid), lambda k, i: (0, 0)),
                pl.BlockSpec((1, hid), lambda k, i: (0, 0)),
                pl.BlockSpec((hid, c_pad), lambda k, i: (0, 0)),
                pl.BlockSpec((1, c_pad), lambda k, i: (0, 0)),
            ],
            # output: parked on block 0 until the final step, then streamed per
            # row tile (each block written exactly once -> no garbage writeback).
            out_specs=pl.BlockSpec(
                (tile_n, c_pad),
                lambda k, i, _ks=k_steps: (jnp.where(k == _ks, i, 0), 0)),
            scratch_shapes=[
                pltpu.VMEM((n, hid), jnp.float32),   # z ping
                pltpu.VMEM((n, hid), jnp.float32),   # z pong
                pltpu.VMEM((n, hid), jnp.float32),   # alpha * h
            ],
        ),
        compiler_params=pltpu.CompilerParams(
            # z is carried in per-core VMEM scratch across both grid axes, so
            # both axes must stay sequential ("parallel" rows on a 2-TC part
            # would need an HBM z round-trip per step instead).
            dimension_semantics=("arbitrary", "arbitrary")),
        cost_estimate=pl.CostEstimate(flops=flops, transcendentals=0,
                                      bytes_accessed=bytes_accessed),
    )(x, adj_prop, w1, b1, w2p, b2p)

    return out_padded[:, :num_classes]


def init_linear(key, fan_in, fan_out):
    """torch.nn.Linear-style init; weight stored as [in, out]."""
    kw, kb = jax.random.split(key)
    bound = 1.0 / jnp.sqrt(fan_in)
    w = jax.random.uniform(kw, (fan_in, fan_out), jnp.float32, -bound, bound)
    b = jax.random.uniform(kb, (1, fan_out), jnp.float32, -bound, bound)
    return w, b


def reference(x, adj_prop_f32, w1, b1, w2, b2, k_steps=K, alpha=ALPHA):
    """Pure-JAX reference using the same (1-alpha)-folded, bf16-quantized adjacency."""
    h = jnp.maximum(x @ w1 + b1, 0.0)
    ah = alpha * h
    z = h
    for _ in range(k_steps):
        z = adj_prop_f32 @ z + ah
    return z @ w2 + b2


if __name__ == "__main__":
    key = jax.random.PRNGKey(0)
    k_x, k_e, k_l1, k_l2 = jax.random.split(key, 4)

    N, IN_DIM, HID, NUM_CLASSES, E = 256, 32, 64, 7, 1024

    x = jax.random.normal(k_x, (N, IN_DIM), jnp.float32)

    # random undirected edge set (both directions included)
    ei = jax.random.randint(k_e, (2, E), 0, N, jnp.int32)
    edge_index = jnp.concatenate([ei, ei[::-1]], axis=1)
    adj_hat = build_adj_hat(edge_index, N)

    w1, b1 = init_linear(k_l1, IN_DIM, HID)
    w2, b2 = init_linear(k_l2, HID, NUM_CLASSES)

    out = appnp_net(x, adj_hat, w1, b1, w2, b2)
    out = jax.block_until_ready(out)
    assert out.shape == (N, NUM_CLASSES)

    # Compare against a reference that uses the identical bf16-quantized,
    # (1-alpha)-folded adjacency so the only differences are accumulation order.
    adj_prop_f32 = ((1.0 - ALPHA) * adj_hat).astype(jnp.bfloat16).astype(jnp.float32)
    with jax.default_matmul_precision("highest"):
        ref = reference(x, adj_prop_f32, w1, b1, w2, b2)
    assert jnp.allclose(out, ref, atol=1e-3, rtol=1e-3)

    print("KERNEL_OK")
</pallas_src>

<mosaic_0001>
module attributes {stable_mosaic.version = 11 : i64} {
  func.func @appnp_kernel(%arg0: i32, %arg1: i32, %arg2: memref<128x32xf32, #tpu.memory_space<vmem>>, %arg3: memref<128x256xbf16, #tpu.memory_space<vmem>>, %arg4: memref<32x64xf32, #tpu.memory_space<vmem>>, %arg5: memref<1x64xf32, #tpu.memory_space<vmem>>, %arg6: memref<64x128xf32, #tpu.memory_space<vmem>>, %arg7: memref<1x128xf32, #tpu.memory_space<vmem>>, %arg8: memref<128x128xf32, #tpu.memory_space<vmem>>, %arg9: memref<256x64xf32, #tpu.memory_space<vmem>>, %arg10: memref<256x64xf32, #tpu.memory_space<vmem>>, %arg11: memref<256x64xf32, #tpu.memory_space<vmem>>) attributes {dimension_semantics = [#tpu.dimension_semantics<arbitrary>, #tpu.dimension_semantics<arbitrary>], iteration_bounds = array<i64: 11, 2>, scalar_prefetch = 0 : i64, scratch_operands = 3 : i64, tpu.core_type = #tpu.core_type<tc>, window_params = [{transform_indices = @transform_0, window_bounds = array<i64: 128, 32>}, {transform_indices = @transform_1, window_bounds = array<i64: 128, 256>}, {pipeline_mode = #tpu.pipeline_mode<synchronous>, transform_indices = @transform_2, window_bounds = array<i64: 32, 64>}, {pipeline_mode = #tpu.pipeline_mode<synchronous>, transform_indices = @transform_3, window_bounds = array<i64: 1, 64>}, {pipeline_mode = #tpu.pipeline_mode<synchronous>, transform_indices = @transform_4, window_bounds = array<i64: 64, 128>}, {pipeline_mode = #tpu.pipeline_mode<synchronous>, transform_indices = @transform_5, window_bounds = array<i64: 1, 128>}, {transform_indices = @transform_6, window_bounds = array<i64: 128, 128>}]} {
    %c128_i32 = arith.constant 128 : i32
    %0 = arith.muli %arg1, %c128_i32 : i32
    %1 = tpu.assume_multiple %0, 128 : i32
    %c0_i32 = arith.constant 0 : i32
    %2 = arith.cmpi eq, %arg0, %c0_i32 : i32
    %3 = arith.extui %2 : i1 to i32
    %c0_i32_0 = arith.constant 0 : i32
    %4 = arith.cmpi ne, %3, %c0_i32_0 : i32
    scf.if %4 {
      %c0 = arith.constant 0 : index
      %c0_16 = arith.constant 0 : index
      %33 = vector.load %arg2[%c0, %c0_16] : memref<128x32xf32, #tpu.memory_space<vmem>>, vector<128x32xf32>
      %c0_17 = arith.constant 0 : index
      %c0_18 = arith.constant 0 : index
      %34 = vector.load %arg4[%c0_17, %c0_18] : memref<32x64xf32, #tpu.memory_space<vmem>>, vector<32x64xf32>
      %cst = arith.constant dense<0.000000e+00> : vector<128x64xf32>
      %35 = tpu.matmul %33, %34, %cst {dimension_numbers = #tpu.dot_dimension_numbers<[1], [0], [0], [1], [0, 0, 1, 1], [], []>} : vector<128x32xf32>, vector<32x64xf32>, vector<128x64xf32> -> vector<128x64xf32>
      %c0_19 = arith.constant 0 : index
      %c0_20 = arith.constant 0 : index
      %36 = vector.load %arg5[%c0_19, %c0_20] : memref<1x64xf32, #tpu.memory_space<vmem>>, vector<1x64xf32>
      %37 = vector.broadcast %36 : vector<1x64xf32> to vector<128x64xf32>
      %38 = arith.addf %35, %37 : vector<128x64xf32>
      %cst_21 = arith.constant 0.000000e+00 : f32
      %39 = vector.broadcast %cst_21 : f32 to vector<128x64xf32>
      %40 = arith.maximumf %38, %39 : vector<128x64xf32>
      %41 = arith.index_cast %1 : i32 to index
      %c0_22 = arith.constant 0 : index
      %42 = vector.load %arg9[%41, %c0_22] : memref<256x64xf32, #tpu.memory_space<vmem>>, vector<128x64xf32>
      tpu.vector_store %arg9[%41, %c0_22], %40 {strides = array<i32>} : memref<256x64xf32, #tpu.memory_space<vmem>>, vector<128x64xf32>,
      %cst_23 = arith.constant 1.000000e-01 : f32
      %43 = vector.broadcast %cst_23 : f32 to vector<128x64xf32>
      %44 = arith.mulf %43, %40 : vector<128x64xf32>
      %45 = arith.index_cast %1 : i32 to index
      %c0_24 = arith.constant 0 : index
      %46 = vector.load %arg11[%45, %c0_24] : memref<256x64xf32, #tpu.memory_space<vmem>>, vector<128x64xf32>
      tpu.vector_store %arg11[%45, %c0_24], %44 {strides = array<i32>} : memref<256x64xf32, #tpu.memory_space<vmem>>, vector<128x64xf32>,
    } else {
    }
    %c2_i32 = arith.constant 2 : i32
    %c0_i32_1 = arith.constant 0 : i32
    %5 = arith.cmpi eq, %c2_i32, %c0_i32_1 : i32
    %c1_i32 = arith.constant 1 : i32
    %6 = arith.select %5, %c1_i32, %c2_i32 : i32
    %7 = arith.remsi %arg0, %6 : i32
    %c0_i32_2 = arith.constant 0 : i32
    %8 = arith.cmpi ne, %7, %c0_i32_2 : i32
    %c0_i32_3 = arith.constant 0 : i32
    %9 = arith.cmpi slt, %7, %c0_i32_3 : i32
    %c0_i32_4 = arith.constant 0 : i32
    %10 = arith.cmpi slt, %6, %c0_i32_4 : i32
    %11 = arith.xori %9, %10 : i1
    %12 = arith.andi %11, %8 : i1
    %13 = arith.addi %7, %6 : i32
    %14 = arith.select %12, %13, %7 : i32
    %c1_i32_5 = arith.constant 1 : i32
    %15 = arith.cmpi eq, %14, %c1_i32_5 : i32
    %16 = arith.extui %15 : i1 to i32
    %c0_i32_6 = arith.constant 0 : i32
    %17 = arith.cmpi ne, %16, %c0_i32_6 : i32
    scf.if %17 {
      %c0 = arith.constant 0 : index
      %c0_16 = arith.constant 0 : index
      %33 = vector.load %arg3[%c0, %c0_16] : memref<128x256xbf16, #tpu.memory_space<vmem>>, vector<128x256xbf16>
      %34 = arith.extf %33 : vector<128x256xbf16> to vector<128x256xf32>
      %c0_17 = arith.constant 0 : index
      %c0_18 = arith.constant 0 : index
      %35 = vector.load %arg9[%c0_17, %c0_18] : memref<256x64xf32, #tpu.memory_space<vmem>>, vector<256x64xf32>
      %cst = arith.constant dense<0.000000e+00> : vector<128x64xf32>
      %36 = tpu.matmul %34, %35, %cst {dimension_numbers = #tpu.dot_dimension_numbers<[1], [0], [0], [1], [0, 0, 1, 1], [], []>} : vector<128x256xf32>, vector<256x64xf32>, vector<128x64xf32> -> vector<128x64xf32>
      %37 = arith.index_cast %1 : i32 to index
      %c0_19 = arith.constant 0 : index
      %38 = vector.load %arg11[%37, %c0_19] : memref<256x64xf32, #tpu.memory_space<vmem>>, vector<128x64xf32>
      %39 = arith.addf %36, %38 : vector<128x64xf32>
      %40 = arith.index_cast %1 : i32 to index
      %c0_20 = arith.constant 0 : index
      %41 = vector.load %arg10[%40, %c0_20] : memref<256x64xf32, #tpu.memory_space<vmem>>, vector<128x64xf32>
      tpu.vector_store %arg10[%40, %c0_20], %39 {strides = array<i32>} : memref<256x64xf32, #tpu.memory_space<vmem>>, vector<128x64xf32>,
      %c10_i32 = arith.constant 10 : i32
      %42 = arith.cmpi eq, %arg0, %c10_i32 : i32
      %43 = arith.extui %42 : i1 to i32
      %c0_i32_21 = arith.constant 0 : i32
      %44 = arith.cmpi ne, %43, %c0_i32_21 : i32
      scf.if %44 {
        %c0_22 = arith.constant 0 : index
        %c0_23 = arith.constant 0 : index
        %45 = vector.load %arg6[%c0_22, %c0_23] : memref<64x128xf32, #tpu.memory_space<vmem>>, vector<64x128xf32>
        %cst_24 = arith.constant dense<0.000000e+00> : vector<128x128xf32>
        %46 = tpu.matmul %39, %45, %cst_24 {dimension_numbers = #tpu.dot_dimension_numbers<[1], [0], [0], [1], [0, 0, 1, 1], [], []>} : vector<128x64xf32>, vector<64x128xf32>, vector<128x128xf32> -> vector<128x128xf32>
        %c0_25 = arith.constant 0 : index
        %c0_26 = arith.constant 0 : index
        %47 = vector.load %arg7[%c0_25, %c0_26] : memref<1x128xf32, #tpu.memory_space<vmem>>, vector<1x128xf32>
        %48 = vector.broadcast %47 : vector<1x128xf32> to vector<128x128xf32>
        %49 = arith.addf %46, %48 : vector<128x128xf32>
        %c0_27 = arith.constant 0 : index
        %c0_28 = arith.constant 0 : index
        %50 = vector.load %arg8[%c0_27, %c0_28] : memref<128x128xf32, #tpu.memory_space<vmem>>, vector<128x128xf32>
        tpu.vector_store %arg8[%c0_27, %c0_28], %49 {strides = array<i32>} : memref<128x128xf32, #tpu.memory_space<vmem>>, vector<128x128xf32>,
      } else {
      }
    } else {
    }
    %c0_i32_7 = arith.constant 0 : i32
    %18 = arith.cmpi sgt, %arg0, %c0_i32_7 : i32
    %c2_i32_8 = arith.constant 2 : i32
    %c0_i32_9 = arith.constant 0 : i32
    %19 = arith.cmpi eq, %c2_i32_8, %c0_i32_9 : i32
    %c1_i32_10 = arith.constant 1 : i32
    %20 = arith.select %19, %c1_i32_10, %c2_i32_8 : i32
    %21 = arith.remsi %arg0, %20 : i32
    %c0_i32_11 = arith.constant 0 : i32
    %22 = arith.cmpi ne, %21, %c0_i32_11 : i32
    %c0_i32_12 = arith.constant 0 : i32
    %23 = arith.cmpi slt, %21, %c0_i32_12 : i32
    %c0_i32_13 = arith.constant 0 : i32
    %24 = arith.cmpi slt, %20, %c0_i32_13 : i32
    %25 = arith.xori %23, %24 : i1
    %26 = arith.andi %25, %22 : i1
    %27 = arith.addi %21, %20 : i32
    %28 = arith.select %26, %27, %21 : i32
    %c0_i32_14 = arith.constant 0 : i32
    %29 = arith.cmpi eq, %28, %c0_i32_14 : i32
    %30 = arith.andi %18, %29 : i1
    %31 = arith.extui %30 : i1 to i32
    %c0_i32_15 = arith.constant 0 : i32
    %32 = arith.cmpi ne, %31, %c0_i32_15 : i32
    scf.if %32 {
      %c0 = arith.constant 0 : index
      %c0_16 = arith.constant 0 : index
      %33 = vector.load %arg3[%c0, %c0_16] : memref<128x256xbf16, #tpu.memory_space<vmem>>, vector<128x256xbf16>
      %34 = arith.extf %33 : vector<128x256xbf16> to vector<128x256xf32>
      %c0_17 = arith.constant 0 : index
      %c0_18 = arith.constant 0 : index
      %35 = vector.load %arg10[%c0_17, %c0_18] : memref<256x64xf32, #tpu.memory_space<vmem>>, vector<256x64xf32>
      %cst = arith.constant dense<0.000000e+00> : vector<128x64xf32>
      %36 = tpu.matmul %34, %35, %cst {dimension_numbers = #tpu.dot_dimension_numbers<[1], [0], [0], [1], [0, 0, 1, 1], [], []>} : vector<128x256xf32>, vector<256x64xf32>, vector<128x64xf32> -> vector<128x64xf32>
      %37 = arith.index_cast %1 : i32 to index
      %c0_19 = arith.constant 0 : index
      %38 = vector.load %arg11[%37, %c0_19] : memref<256x64xf32, #tpu.memory_space<vmem>>, vector<128x64xf32>
      %39 = arith.addf %36, %38 : vector<128x64xf32>
      %40 = arith.index_cast %1 : i32 to index
      %c0_20 = arith.constant 0 : index
      %41 = vector.load %arg9[%40, %c0_20] : memref<256x64xf32, #tpu.memory_space<vmem>>, vector<128x64xf32>
      tpu.vector_store %arg9[%40, %c0_20], %39 {strides = array<i32>} : memref<256x64xf32, #tpu.memory_space<vmem>>, vector<128x64xf32>,
      %c10_i32 = arith.constant 10 : i32
      %42 = arith.cmpi eq, %arg0, %c10_i32 : i32
      %43 = arith.extui %42 : i1 to i32
      %c0_i32_21 = arith.constant 0 : i32
      %44 = arith.cmpi ne, %43, %c0_i32_21 : i32
      scf.if %44 {
        %c0_22 = arith.constant 0 : index
        %c0_23 = arith.constant 0 : index
        %45 = vector.load %arg6[%c0_22, %c0_23] : memref<64x128xf32, #tpu.memory_space<vmem>>, vector<64x128xf32>
        %cst_24 = arith.constant dense<0.000000e+00> : vector<128x128xf32>
        %46 = tpu.matmul %39, %45, %cst_24 {dimension_numbers = #tpu.dot_dimension_numbers<[1], [0], [0], [1], [0, 0, 1, 1], [], []>} : vector<128x64xf32>, vector<64x128xf32>, vector<128x128xf32> -> vector<128x128xf32>
        %c0_25 = arith.constant 0 : index
        %c0_26 = arith.constant 0 : index
        %47 = vector.load %arg7[%c0_25, %c0_26] : memref<1x128xf32, #tpu.memory_space<vmem>>, vector<1x128xf32>
        %48 = vector.broadcast %47 : vector<1x128xf32> to vector<128x128xf32>
        %49 = arith.addf %46, %48 : vector<128x128xf32>
        %c0_27 = arith.constant 0 : index
        %c0_28 = arith.constant 0 : index
        %50 = vector.load %arg8[%c0_27, %c0_28] : memref<128x128xf32, #tpu.memory_space<vmem>>, vector<128x128xf32>
        tpu.vector_store %arg8[%c0_27, %c0_28], %49 {strides = array<i32>} : memref<128x128xf32, #tpu.memory_space<vmem>>, vector<128x128xf32>,
      } else {
      }
    } else {
    }
    return
  }
  func.func @transform_0(%arg0: i32, %arg1: i32) -> (i32, i32) {
    %c0_i32 = arith.constant 0 : i32
    %0 = arith.cmpi eq, %arg0, %c0_i32 : i32
    %c0_i32_0 = arith.constant 0 : i32
    %1 = arith.select %0, %arg1, %c0_i32_0 : i32
    %c0_i32_1 = arith.constant 0 : i32
    %c0_i32_2 = arith.constant 0 : i32
    return %1, %c0_i32_1 : i32, i32
  }
  func.func @transform_1(%arg0: i32, %arg1: i32) -> (i32, i32) {
    %c0_i32 = arith.constant 0 : i32
    %0 = arith.cmpi eq, %arg0, %c0_i32 : i32
    %c0_i32_0 = arith.constant 0 : i32
    %1 = arith.select %0, %c0_i32_0, %arg1 : i32
    %c0_i32_1 = arith.constant 0 : i32
    %c0_i32_2 = arith.constant 0 : i32
    return %1, %c0_i32_1 : i32, i32
  }
  func.func @transform_2(%arg0: i32, %arg1: i32) -> (i32, i32) {
    %c0_i32 = arith.constant 0 : i32
    %c0_i32_0 = arith.constant 0 : i32
    %c0_i32_1 = arith.constant 0 : i32
    return %c0_i32, %c0_i32_0 : i32, i32
  }
  func.func @transform_3(%arg0: i32, %arg1: i32) -> (i32, i32) {
    %c0_i32 = arith.constant 0 : i32
    %c0_i32_0 = arith.constant 0 : i32
    %c0_i32_1 = arith.constant 0 : i32
    return %c0_i32, %c0_i32_0 : i32, i32
  }
  func.func @transform_4(%arg0: i32, %arg1: i32) -> (i32, i32) {
    %c0_i32 = arith.constant 0 : i32
    %c0_i32_0 = arith.constant 0 : i32
    %c0_i32_1 = arith.constant 0 : i32
    return %c0_i32, %c0_i32_0 : i32, i32
  }
  func.func @transform_5(%arg0: i32, %arg1: i32) -> (i32, i32) {
    %c0_i32 = arith.constant 0 : i32
    %c0_i32_0 = arith.constant 0 : i32
    %c0_i32_1 = arith.constant 0 : i32
    return %c0_i32, %c0_i32_0 : i32, i32
  }
  func.func @transform_6(%arg0: i32, %arg1: i32) -> (i32, i32) {
    %c10_i32 = arith.constant 10 : i32
    %0 = arith.cmpi eq, %arg0, %c10_i32 : i32
    %c0_i32 = arith.constant 0 : i32
    %1 = arith.select %0, %arg1, %c0_i32 : i32
    %c0_i32_0 = arith.constant 0 : i32
    %c0_i32_1 = arith.constant 0 : i32
    return %1, %c0_i32_0 : i32, i32
  }
}

</mosaic_0001>

<llo_original>
// kernel: tpu_custom_call.1
$region0: #{tpu_custom_call.1}
  #allocation0 [shape = 'u32[]', space=smem, size = 0x4, offset = 0x4, fixed_abs, tag = 'smem constant byte address 0x4 - core index']
  #allocation1 [shape = 'u32[144,128]{1,0:T(1,128)}', space=vmem, size = 0x12000, scoped, tag = 'internal scratch']
  #allocation2 [shape = 'f32[256,64]{1,0:T(8,128)}', space=vmem, size = 0x20000, scoped, tag = 'scratch operand']
  #allocation3 [shape = 'f32[256,64]{1,0:T(8,128)}', space=vmem, size = 0x20000, scoped, tag = 'scratch operand']
  #allocation4 [shape = 'f32[256,64]{1,0:T(8,128)}', space=vmem, size = 0x20000, scoped, tag = 'scratch operand']
  %s0 = inlined_call_operand.vmem [shape: f32[256,32], index: 0, kind: input, shape index: {}]
  %s1 = inlined_call_operand.vmem [shape: bf16[256,256], index: 1, kind: input, shape index: {}]
  %s2 = inlined_call_operand.hbm [shape: f32[32,64], index: 2, kind: input, shape index: {}]
  %s3 = inlined_call_operand.vmem [shape: f32[1,64], index: 3, kind: input, shape index: {}]
  %s4 = inlined_call_operand.vmem [shape: f32[64,128], index: 4, kind: input, shape index: {}]
  %s5 = inlined_call_operand.vmem [shape: f32[1,128], index: 5, kind: input, shape index: {}]
  %s6 = inlined_call_operand.hbm [shape: f32[256,128], index: 6, kind: output, shape index: {}]
  %s7 = sld [smem:[#allocation0]]
  $region81: #{tpu_custom_call.1} parent=0
    _
  %s9 = ssub.s32 1, %s7
  %s10 = scalar_select 0, %s9, %s7
  $region1: #{tpu_custom_call.1} parent=0
    #allocation5 [shape = 'u8[16384]{0}', space=vmem, size = 0x4000, scoped, tag = 'input window, operand 2, single buffered']
    #allocation6 [shape = 's32[2]{0}', space=sflag, size = 0x8, scoped, tag = 'scoped memory for tpu_custom_call.1']
    #allocation7 [shape = 's32[2]{0}', space=sflag, size = 0x8, scoped, tag = 'scoped memory for tpu_custom_call.1']
    #allocation8 [shape = 'u8[131072]{0}', space=vmem, size = 0x20000, scoped, tag = 'output window, operand 0']
    %11 = vsyncpa [#allocation6], 0
    %12 = vsyncpa [#allocation7], 0
    %s13 = scalar_lea.sflag [#allocation7], 1
    %14 = vsyncpa %s13, 0
    loop: start=0, step=1, limit=24
    $region2: #{tpu_custom_call.1} parent=1 // loop_pre_header
      _
    $region3: #{tpu_custom_call.1} parent=1 // loop_header
      %s16 = sphi 0, %s20
      %p17 = scmp.ge.s32.totalorder %s16, 24
      %s23 = sphi 0, %s35
      %s24 = sphi 0, %s31
      %s25 = sphi 0, %s23
      %s26 = sphi 0, %s24
      %s27 = sphi 0, %s25
      %s28 = sphi 0, %s26
      %s42 = sphi 0, %s44
      %s45 = sphi 0, %s42
      %s46 = sphi 0, %s45
      %s62 = sphi 0, %s46
      %s72 = sphi 0, %s74
      %s75 = sphi 0, %s72
      %s76 = sphi 0, %s75
      %s92 = sphi 0, %s76
      %s96 = sphi 0, %s96
      %s98 = sphi 0, %s96
      %s99 = sphi 0, %s98
      %s113 = sphi 0, %s99
      %s117 = sphi 0, %s117
      %s119 = sphi 0, %s117
      %s120 = sphi 0, %s119
      %s134 = sphi 0, %s120
      %s138 = sphi 0, %s138
      %s140 = sphi 0, %s138
      %s141 = sphi 0, %s140
      %s155 = sphi 0, %s141
      %s159 = sphi 0, %s159
      %s161 = sphi 0, %s159
      %s162 = sphi 0, %s161
      %s176 = sphi 0, %s162
      %s186 = sphi 0, %s188
      %s189 = sphi 0, %s186
      %s190 = sphi 0, %s189
      %s206 = sphi 0, %s190
    $region4: #{tpu_custom_call.1} parent=1 // loop_header_branch
      %19 = sbr.rel (%p17) target = $region8
    $region5: #{tpu_custom_call.1} parent=1 // loop_body
      %s21 = ssub.s32 %s16, 1
      %s22 = ssub.s32 %s16, 2
      %s29 = sadd.s32 1, %s24
      %p30 = scmp.ge.s32.totalorder %s29, 2
      %s31 = scalar_select %p30, 0, %s29
      %s32 = sadd.s32 1, %s23
      %s33 = scalar_select %p30, %s32, %s23
      %p34 = scmp.ge.s32.totalorder %s33, 11
      %s35 = scalar_select %p34, 0, %s33
      %p36 = scmp.eq.s32.totalorder %s23, 0
      %s37 = scalar_select %p36, %s24, 0
      %p38 = scmp.eq.s32.totalorder %s35, 0
      %s39 = scalar_select %p38, %s31, 0
      %s40 = ssub.s32 %s37, %s39
      %p41 = scmp.eq.s32.totalorder %s40, 0
      %s43 = sadd.s32 %s42, 1
      %s44 = scalar_select %p41, %s42, %s43
      %p47 = pneg %p41
      %p48 = scmp.eq.s32.totalorder %s16, 21
      %p49 = por %p47, %p48
      %p50 = scmp.ne.s32.totalorder %s42, %s45
      %p51 = scmp.eq.s32.totalorder %s16, 0
      %p52 = por %p50, %p51
      %p53 = scmp.ne.s32.totalorder %s42, %s45
      %p54 = scmp.eq.s32.totalorder %s21, 21
      %p55 = por %p53, %p54
      %p56 = scmp.ne.s32.totalorder %s45, %s46
      %p57 = scmp.eq.s32.totalorder %s21, 0
      %p58 = por %p56, %p57
      %p59 = scmp.ne.s32.totalorder %s45, %s46
      %p60 = scmp.eq.s32.totalorder %s22, 21
      %p61 = por %p59, %p60
      %p63 = scmp.ne.s32.totalorder %s46, %s62
      %p64 = scmp.eq.s32.totalorder %s22, 0
      %p65 = por %p63, %p64
      %p66 = scmp.eq.s32.totalorder %s23, 0
      %s67 = scalar_select %p66, 0, %s24
      %p68 = scmp.eq.s32.totalorder %s35, 0
      %s69 = scalar_select %p68, 0, %s31
      %s70 = ssub.s32 %s67, %s69
      %p71 = scmp.eq.s32.totalorder %s70, 0
      %s73 = sadd.s32 %s72, 1
      %s74 = scalar_select %p71, %s72, %s73
      %p77 = pneg %p71
      %p78 = scmp.eq.s32.totalorder %s16, 21
      %p79 = por %p77, %p78
      %p80 = scmp.ne.s32.totalorder %s72, %s75
      %p81 = scmp.eq.s32.totalorder %s16, 0
      %p82 = por %p80, %p81
      %p83 = scmp.ne.s32.totalorder %s72, %s75
      %p84 = scmp.eq.s32.totalorder %s21, 21
      %p85 = por %p83, %p84
      %p86 = scmp.ne.s32.totalorder %s75, %s76
      %p87 = scmp.eq.s32.totalorder %s21, 0
      %p88 = por %p86, %p87
      %p89 = scmp.ne.s32.totalorder %s75, %s76
      %p90 = scmp.eq.s32.totalorder %s22, 21
      %p91 = por %p89, %p90
      %p93 = scmp.ne.s32.totalorder %s76, %s92
      %p94 = scmp.eq.s32.totalorder %s22, 0
      %p95 = por %p93, %p94
      %s97 = sadd.s32 %s96, 1
      %p100 = scmp.eq.s32.totalorder %s16, 21
      %p101 = scmp.ne.s32.totalorder %s96, %s98
      %p102 = scmp.eq.s32.totalorder %s16, 0
      %p103 = por %p101, %p102
      %p104 = scmp.ne.s32.totalorder %s96, %s98
      %p105 = scmp.eq.s32.totalorder %s21, 21
      %p106 = por %p104, %p105
      %p107 = scmp.ne.s32.totalorder %s98, %s99
      %p108 = scmp.eq.s32.totalorder %s21, 0
      %p109 = por %p107, %p108
      %p110 = scmp.ne.s32.totalorder %s98, %s99
      %p111 = scmp.eq.s32.totalorder %s22, 21
      %p112 = por %p110, %p111
      %p114 = scmp.ne.s32.totalorder %s99, %s113
      %p115 = scmp.eq.s32.totalorder %s22, 0
      %p116 = por %p114, %p115
      %s118 = sadd.s32 %s117, 1
      %p121 = scmp.eq.s32.totalorder %s16, 21
      %p122 = scmp.ne.s32.totalorder %s117, %s119
      %p123 = scmp.eq.s32.totalorder %s16, 0
      %p124 = por %p122, %p123
      %p125 = scmp.ne.s32.totalorder %s117, %s119
      %p126 = scmp.eq.s32.totalorder %s21, 21
      %p127 = por %p125, %p126
      %p128 = scmp.ne.s32.totalorder %s119, %s120
      %p129 = scmp.eq.s32.totalorder %s21, 0
      %p130 = por %p128, %p129
      %p131 = scmp.ne.s32.totalorder %s119, %s120
      %p132 = scmp.eq.s32.totalorder %s22, 21
      %p133 = por %p131, %p132
      %p135 = scmp.ne.s32.totalorder %s120, %s134
      %p136 = scmp.eq.s32.totalorder %s22, 0
      %p137 = por %p135, %p136
      %s139 = sadd.s32 %s138, 1
      %p142 = scmp.eq.s32.totalorder %s16, 21
      %p143 = scmp.ne.s32.totalorder %s138, %s140
      %p144 = scmp.eq.s32.totalorder %s16, 0
      %p145 = por %p143, %p144
      %p146 = scmp.ne.s32.totalorder %s138, %s140
      %p147 = scmp.eq.s32.totalorder %s21, 21
      %p148 = por %p146, %p147
      %p149 = scmp.ne.s32.totalorder %s140, %s141
      %p150 = scmp.eq.s32.totalorder %s21, 0
      %p151 = por %p149, %p150
      %p152 = scmp.ne.s32.totalorder %s140, %s141
      %p153 = scmp.eq.s32.totalorder %s22, 21
      %p154 = por %p152, %p153
      %p156 = scmp.ne.s32.totalorder %s141, %s155
      %p157 = scmp.eq.s32.totalorder %s22, 0
      %p158 = por %p156, %p157
      %s160 = sadd.s32 %s159, 1
      %p163 = scmp.eq.s32.totalorder %s16, 21
      %p164 = scmp.ne.s32.totalorder %s159, %s161
      %p165 = scmp.eq.s32.totalorder %s16, 0
      %p166 = por %p164, %p165
      %p167 = scmp.ne.s32.totalorder %s159, %s161
      %p168 = scmp.eq.s32.totalorder %s21, 21
      %p169 = por %p167, %p168
      %p170 = scmp.ne.s32.totalorder %s161, %s162
      %p171 = scmp.eq.s32.totalorder %s21, 0
      %p172 = por %p170, %p171
      %p173 = scmp.ne.s32.totalorder %s161, %s162
      %p174 = scmp.eq.s32.totalorder %s22, 21
      %p175 = por %p173, %p174
      %p177 = scmp.ne.s32.totalorder %s162, %s176
      %p178 = scmp.eq.s32.totalorder %s22, 0
      %p179 = por %p177, %p178
      %p180 = scmp.eq.s32.totalorder %s23, 10
      %s181 = scalar_select %p180, %s24, 0
      %p182 = scmp.eq.s32.totalorder %s35, 10
      %s183 = scalar_select %p182, %s31, 0
      %s184 = ssub.s32 %s181, %s183
      %p185 = scmp.eq.s32.totalorder %s184, 0
      %s187 = sadd.s32 %s186, 1
      %s188 = scalar_select %p185, %s186, %s187
      %p191 = pneg %p185
      %p192 = scmp.eq.s32.totalorder %s16, 21
      %p193 = por %p191, %p192
      %p194 = scmp.ne.s32.totalorder %s186, %s189
      %p195 = scmp.eq.s32.totalorder %s16, 0
      %p196 = por %p194, %p195
      %p197 = scmp.ne.s32.totalorder %s186, %s189
      %p198 = scmp.eq.s32.totalorder %s21, 21
      %p199 = por %p197, %p198
      %p200 = scmp.ne.s32.totalorder %s189, %s190
      %p201 = scmp.eq.s32.totalorder %s21, 0
      %p202 = por %p200, %p201
      %p203 = scmp.ne.s32.totalorder %s189, %s190
      %p204 = scmp.eq.s32.totalorder %s22, 21
      %p205 = por %p203, %p204
      %p207 = scmp.ne.s32.totalorder %s190, %s206
      %p208 = scmp.eq.s32.totalorder %s22, 0
      %p209 = por %p207, %p208
      %p210 = scmp.le.s32.totalorder 1, %s16
      %p211 = scmp.lt.s32.totalorder %s16, 23
      %p212 = pnand %p210, %p211
      %p213 = pneg %p212
      // Predicated region
      $region9: #{tpu_custom_call.1} parent=5 // pred_check
        _
      $region10: #{tpu_custom_call.1} parent=5 // pred_check_branch
        %215 = sbr.rel (%p212) target = $region12
      $region11: #{tpu_custom_call.1} parent=5 // pred_region
        %s216 = ssub.s32 %s16, 1
        // Predicated region
        $region13: #{tpu_custom_call.1} parent=11 // pred_check
          %p217 = pneg %p109
        $region14: #{tpu_custom_call.1} parent=11 // pred_check_branch
          %219 = sbr.rel (%p217) target = $region16
        $region15: #{tpu_custom_call.1} parent=11 // pred_region
          %s221 = ssub.s32 512, 512
          %222 = vsyncadd [#allocation6], %s221
          %s223 = sshll.u32 [#allocation5], 4
          %s224 = int_to_ptr.vmem [resolvable:$true] %s223
          %229 = dma.hbm_to_vmem [thread:$0]  %s2, 512, %s224, [#allocation6], 128, 128, 8
        $region16: #{tpu_custom_call.1} parent=11 // pred_fallthru
          _
        // Predicated region
        $region17: #{tpu_custom_call.1} parent=11 // pred_check
          %p230 = pneg %p130
        $region18: #{tpu_custom_call.1} parent=11 // pred_check_branch
          %232 = sbr.rel (%p230) target = $region20
        $region19: #{tpu_custom_call.1} parent=11 // pred_region
          _
        $region20: #{tpu_custom_call.1} parent=11 // pred_fallthru
          _
        // Predicated region
        $region21: #{tpu_custom_call.1} parent=11 // pred_check
          %p233 = pneg %p151
        $region22: #{tpu_custom_call.1} parent=11 // pred_check_branch
          %235 = sbr.rel (%p233) target = $region24
        $region23: #{tpu_custom_call.1} parent=11 // pred_region
          _
        $region24: #{tpu_custom_call.1} parent=11 // pred_fallthru
          _
        // Predicated region
        $region25: #{tpu_custom_call.1} parent=11 // pred_check
          %p236 = pneg %p172
        $region26: #{tpu_custom_call.1} parent=11 // pred_check_branch
          %238 = sbr.rel (%p236) target = $region28
        $region27: #{tpu_custom_call.1} parent=11 // pred_region
          _
        $region28: #{tpu_custom_call.1} parent=11 // pred_fallthru
          _
      $region12: #{tpu_custom_call.1} parent=5 // pred_fallthru
        _
      %p239 = scmp.lt.s32.totalorder %s16, 22
      // Predicated region
      $region29: #{tpu_custom_call.1} parent=5 // pred_check
        %p240 = pneg %p239
      $region30: #{tpu_custom_call.1} parent=5 // pred_check_branch
        %242 = sbr.rel (%p240) target = $region32
      $region31: #{tpu_custom_call.1} parent=5 // pred_region
        // Predicated region
        $region33: #{tpu_custom_call.1} parent=31 // pred_check
          %p243 = pneg %p52
        $region34: #{tpu_custom_call.1} parent=31 // pred_check_branch
          %245 = sbr.rel (%p243) target = $region36
        $region35: #{tpu_custom_call.1} parent=31 // pred_region
          %p246 = scmp.eq.s32.totalorder %s23, 0
          %s247 = scalar_select %p246, %s24, 0
          %s248 = smul.u32 16, %s247
          %p249 = scmp.lt.s32.totalorder %s248, 31
          %s250 = scalar_select %p249, %s248, 31
          %s251 = smul.addr %s250, 8
          %s252 = scalar_lea.vmem %s0, %s251
          %p253 = scmp.eq.s32.totalorder %s23, 0
          %s254 = scalar_select %p253, %s24, 0
          %s255 = smul.u32 16, %s254
        $region36: #{tpu_custom_call.1} parent=31 // pred_fallthru
          _
        // Predicated region
        $region37: #{tpu_custom_call.1} parent=31 // pred_check
          %p256 = pneg %p82
        $region38: #{tpu_custom_call.1} parent=31 // pred_check_branch
          %258 = sbr.rel (%p256) target = $region40
        $region39: #{tpu_custom_call.1} parent=31 // pred_region
          %p259 = scmp.eq.s32.totalorder %s23, 0
          %s260 = scalar_select %p259, 0, %s24
          %s261 = smul.u32 16, %s260
          %p262 = scmp.lt.s32.totalorder %s261, 31
          %s263 = scalar_select %p262, %s261, 31
          %s264 = smul.addr %s263, 2
          %s265 = smul.addr %s264, 4
          %s266 = scalar_lea.vmem %s1, %s265
          %p267 = scmp.eq.s32.totalorder %s23, 0
          %s268 = scalar_select %p267, 0, %s24
          %s269 = smul.u32 16, %s268
        $region40: #{tpu_custom_call.1} parent=31 // pred_fallthru
          _
      $region32: #{tpu_custom_call.1} parent=5 // pred_fallthru
        _
      %p270 = scmp.le.s32.totalorder 1, %s16
      %p271 = scmp.lt.s32.totalorder %s16, 23
      %p272 = pnand %p270, %p271
      %p273 = pneg %p272
      // Predicated region
      $region41: #{tpu_custom_call.1} parent=5 // pred_check
        _
      $region42: #{tpu_custom_call.1} parent=5 // pred_check_branch
        %275 = sbr.rel (%p272) target = $region44
      $region43: #{tpu_custom_call.1} parent=5 // pred_region
        %s276 = ssub.s32 %s16, 1
        // Predicated region
        $region45: #{tpu_custom_call.1} parent=43 // pred_check
          %p277 = pneg %p109
        $region46: #{tpu_custom_call.1} parent=43 // pred_check_branch
          %279 = sbr.rel (%p277) target = $region48
        $region47: #{tpu_custom_call.1} parent=43 // pred_region
          %280 = dma.done [#allocation6], 512
        $region48: #{tpu_custom_call.1} parent=43 // pred_fallthru
          _
        %p281 = scmp.eq.s32.totalorder %s25, 0
        %s282 = scalar_select %p281, %s26, 0
        %s283 = smul.u32 16, %s282
        %p284 = scmp.lt.s32.totalorder %s283, 31
        %s285 = scalar_select %p284, %s283, 31
        %s286 = smul.addr %s285, 8
        %s287 = scalar_lea.vmem %s0, %s286
        %p288 = pneg %p58
        %p289 = pneg %p55
        %p290 = scmp.eq.s32.totalorder %s25, 0
        %s291 = scalar_select %p290, 0, %s26
        %s292 = smul.u32 16, %s291
        %p293 = scmp.lt.s32.totalorder %s292, 31
        %s294 = scalar_select %p293, %s292, 31
        %s295 = smul.addr %s294, 2
        %s296 = smul.addr %s295, 4
        %s297 = scalar_lea.vmem %s1, %s296
        %p298 = pneg %p88
        %p299 = pneg %p85
        %p300 = pneg %p109
        %p301 = pneg %p106
        %p302 = pneg %p130
        %p303 = pneg %p127
        %p304 = pneg %p151
        %p305 = pneg %p148
        %p306 = pneg %p172
        %p307 = pneg %p169
        %p308 = pneg %p202
        %p309 = pneg %p199
        %s310 = sand.u32 %s189, 1
        %s311 = scalar_lea.sflag [#allocation7], %s310
        %s312 = sand.u32 %s189, 1
        %s313 = smul.addr %s312, 128
        %s314 = scalar_lea.vmem [#allocation8], %s313
        %p315 = scmp.eq.s32.totalorder %s25, 0
        %s316 = scalar_select %p315, %s26, 0
        %s317 = smul.u32 16, %s316
        %p318 = scmp.lt.s32.totalorder %s317, 31
        %s319 = scalar_select %p318, %s317, 31
        %s320 = smul.addr %s319, 8
        %s321 = scalar_lea.vmem %s0, %s320
        %p322 = scmp.eq.s32.totalorder %s25, 0
        %s323 = scalar_select %p322, %s26, 0
        %s324 = smul.u32 16, %s323
        %p325 = scmp.eq.s32.totalorder %s25, 0
        %s326 = scalar_select %p325, 0, %s26
        %s327 = smul.u32 16, %s326
        %p328 = scmp.lt.s32.totalorder %s327, 31
        %s329 = scalar_select %p328, %s327, 31
        %s330 = smul.addr %s329, 2
        %s331 = smul.addr %s330, 4
        %s332 = scalar_lea.vmem %s1, %s331
        %p333 = scmp.eq.s32.totalorder %s25, 0
        %s334 = scalar_select %p333, 0, %s26
        %s335 = smul.u32 16, %s334
        %p336 = scmp.eq.s32.totalorder %s25, 10
        %s337 = scalar_select %p336, %s26, 0
        %s338 = smul.u32 16, %s337
        %s339 = smul.u32 %s26, 128
        %p340 = scmp.eq.s32.totalorder %s25, 0
        // Predicated region
        $region49: #{tpu_custom_call.1} parent=43 // pred_check
          %p341 = pneg %p340
        $region50: #{tpu_custom_call.1} parent=43 // pred_check_branch
          %343 = sbr.rel (%p341) target = $region52
        $region51: #{tpu_custom_call.1} parent=43 // pred_region
          %v344 = vld [vmem:[%s321] sm:$0xff]
          %v345 = vld [vmem:[%s321 + $0x8] sm:$0xff]
          %v346 = vld [vmem:[%s321 + $0x10] sm:$0xff]
          %v347 = vld [vmem:[%s321 + $0x18] sm:$0xff]
          %v348 = vld [vmem:[%s321 + $0x20] sm:$0xff]
          %v349 = vld [vmem:[%s321 + $0x28] sm:$0xff]
          %v350 = vld [vmem:[%s321 + $0x30] sm:$0xff]
          %v351 = vld [vmem:[%s321 + $0x38] sm:$0xff]
          %v352 = vld [vmem:[%s321 + $0x40] sm:$0xff]
          %v353 = vld [vmem:[%s321 + $0x48] sm:$0xff]
          %v354 = vld [vmem:[%s321 + $0x50] sm:$0xff]
          %v355 = vld [vmem:[%s321 + $0x58] sm:$0xff]
          %v356 = vld [vmem:[%s321 + $0x60] sm:$0xff]
          %v357 = vld [vmem:[%s321 + $0x68] sm:$0xff]
          %v358 = vld [vmem:[%s321 + $0x70] sm:$0xff]
          %v359 = vld [vmem:[%s321 + $0x78] sm:$0xff]
          %v360 = vld [vmem:[#allocation5] sm:$0xff]
          %v361 = vld [vmem:[#allocation5 + $0x8] sm:$0xff]
          %v362 = vld [vmem:[#allocation5 + $0x10] sm:$0xff]
          %v363 = vld [vmem:[#allocation5 + $0x18] sm:$0xff]
          %v364 = vld [vmem:[%s3] sm:$0x1]
          %v366 = vlaneseq
          %v367 = vshrl.u32 %v366, 7
          %v368 = vsub.s32 0, %v367
          %v369 = vrot.slane %v364, %v368
          %vm371 = vcmask 261120
          %v373 = vsel %vm371, %v344, 0
          %v376 = vsel %vm371, %v345, 0
          %v379 = vsel %vm371, %v346, 0
          %v382 = vsel %vm371, %v347, 0
          %v385 = vsel %vm371, %v348, 0
          %v388 = vsel %vm371, %v349, 0
          %v391 = vsel %vm371, %v350, 0
          %v394 = vsel %vm371, %v351, 0
          %v397 = vsel %vm371, %v352, 0
          %v400 = vsel %vm371, %v353, 0
          %v403 = vsel %vm371, %v354, 0
          %v406 = vsel %vm371, %v355, 0
          %v409 = vsel %vm371, %v356, 0
          %v412 = vsel %vm371, %v357, 0
          %v415 = vsel %vm371, %v358, 0
          %v418 = vsel %vm371, %v359, 0
          %420 = vmatprep.subr.mxu0 0.0
          %421 = vmatpush1.msra.mxu0 %v360
          %422 = vmatprep.subr.mxu0 0.0
          %423 = vmatpush1.msra.mxu0 %v361
          %424 = vmatprep.subr.mxu0 0.0
          %425 = vmatpush1.msra.mxu0 %v362
          %426 = vmatprep.subr.mxu0 0.0
          %427 = vmatpush1.msra.mxu0 %v363
          %428 = vmatprep.subr.mxu0 0.0
          %429 = vmatpush1.msra.mxu0 0.0
          %430 = vmatprep.subr.mxu0 0.0
          %431 = vmatpush1.msra.mxu0 0.0
          %432 = vmatprep.subr.mxu0 0.0
          %433 = vmatpush1.msra.mxu0 0.0
          %434 = vmatprep.subr.mxu0 0.0
          %435 = vmatpush1.msra.mxu0 0.0
          %436 = vmatprep.subr.mxu0 0.0
          %437 = vmatpush1.msra.mxu0 0.0
          %438 = vmatprep.subr.mxu0 0.0
          %439 = vmatpush1.msra.mxu0 0.0
          %440 = vmatprep.subr.mxu0 0.0
          %441 = vmatpush1.msra.mxu0 0.0
          %442 = vmatprep.subr.mxu0 0.0
          %443 = vmatpush1.msra.mxu0 0.0
          %444 = vmatprep.subr.mxu0 0.0
          %445 = vmatpush1.msra.mxu0 0.0
          %446 = vmatprep.subr.mxu0 0.0
          %447 = vmatpush1.msra.mxu0 0.0
          %448 = vmatprep.subr.mxu0 0.0
          %449 = vmatpush1.msra.mxu0 0.0
          %450 = vmatprep.subr.mxu0 0.0
          %451 = vmatpush1.msra.mxu0 0.0
          %452 = vmatprep.subr.mxu0 0.0
          %453 = vmatpush1.msra.mxu0 0.0
          %454 = vmatprep.subr.mxu0 0.0
          %455 = vmatpush1.msra.mxu0 0.0
          %456 = vmatprep.subr.mxu0 0.0
          %457 = vmatpush1.msra.mxu0 0.0
          %458 = vmatprep.subr.mxu0 0.0
          %459 = vmatpush1.msra.mxu0 0.0
          %460 = vmatprep.subr.mxu0 0.0
          %461 = vmatpush1.msra.mxu0 0.0
          %462 = vmatprep.subr.mxu0 0.0
          %463 = vmatpush1.msra.mxu0 0.0
          %464 = vmatprep.subr.mxu0 0.0
          %465 = vmatpush1.msra.mxu0 0.0
          %466 = vmatprep.subr.mxu0 0.0
          %467 = vmatpush1.msra.mxu0 0.0
          %468 = vmatprep.subr.mxu0 0.0
          %469 = vmatpush1.msra.mxu0 0.0
          %470 = vmatprep.subr.mxu0 0.0
          %471 = vmatpush1.msra.mxu0 0.0
          %472 = vmatprep.subr.mxu0 0.0
          %473 = vmatpush1.msra.mxu0 0.0
          %474 = vmatprep.subr.mxu0 0.0
          %475 = vmatpush1.msra.mxu0 0.0
          %476 = vmatprep.subr.mxu0 0.0
          %477 = vmatpush1.msra.mxu0 0.0
          %478 = vmatprep.subr.mxu0 0.0
          %479 = vmatpush1.msra.mxu0 0.0
          %480 = vmatprep.subr.mxu0 0.0
          %481 = vmatpush1.msra.mxu0 0.0
          %482 = vmatprep.subr.mxu0 0.0
          %483 = vmatpush1.msra.mxu0 0.0
          %484 = vmatprep.mubr.f32.mxu0 0.0
          %485 = vmatmul.mubr.f32.gmra.mrb[0].mxu0 %v373
          %v486 = vpop.f32.mrb[0].mxu0
          %v487 = vadd.f32 %v369, %v486
          %v488 = vpop.f32.mrb[0].mxu0
          %489 = vmatprep.mubr.f32.mxu0 0.0
          %490 = vmatmul.mubr.f32.gmra.mrb[0].mxu0 %v376
          %v491 = vpop.f32.mrb[0].mxu0
          %v492 = vadd.f32 %v369, %v491
          %v493 = vpop.f32.mrb[0].mxu0
          %494 = vmatprep.mubr.f32.mxu0 0.0
          %495 = vmatmul.mubr.f32.gmra.mrb[0].mxu0 %v379
          %v496 = vpop.f32.mrb[0].mxu0
          %v497 = vadd.f32 %v369, %v496
          %v498 = vpop.f32.mrb[0].mxu0
          %499 = vmatprep.mubr.f32.mxu0 0.0
          %500 = vmatmul.mubr.f32.gmra.mrb[0].mxu0 %v382
          %v501 = vpop.f32.mrb[0].mxu0
          %v502 = vadd.f32 %v369, %v501
          %v503 = vpop.f32.mrb[0].mxu0
          %504 = vmatprep.mubr.f32.mxu0 0.0
          %505 = vmatmul.mubr.f32.gmra.mrb[0].mxu0 %v385
          %v506 = vpop.f32.mrb[0].mxu0
          %v507 = vadd.f32 %v369, %v506
          %v508 = vpop.f32.mrb[0].mxu0
          %509 = vmatprep.mubr.f32.mxu0 0.0
          %510 = vmatmul.mubr.f32.gmra.mrb[0].mxu0 %v388
          %v511 = vpop.f32.mrb[0].mxu0
          %v512 = vadd.f32 %v369, %v511
          %v513 = vpop.f32.mrb[0].mxu0
          %514 = vmatprep.mubr.f32.mxu0 0.0
          %515 = vmatmul.mubr.f32.gmra.mrb[0].mxu0 %v391
          %v516 = vpop.f32.mrb[0].mxu0
          %v517 = vadd.f32 %v369, %v516
          %v518 = vpop.f32.mrb[0].mxu0
          %519 = vmatprep.mubr.f32.mxu0 0.0
          %520 = vmatmul.mubr.f32.gmra.mrb[0].mxu0 %v394
          %v521 = vpop.f32.mrb[0].mxu0
          %v522 = vadd.f32 %v369, %v521
          %v523 = vpop.f32.mrb[0].mxu0
          %524 = vmatprep.mubr.f32.mxu0 0.0
          %525 = vmatmul.mubr.f32.gmra.mrb[0].mxu0 %v397
          %v526 = vpop.f32.mrb[0].mxu0
          %v527 = vadd.f32 %v369, %v526
          %v528 = vpop.f32.mrb[0].mxu0
          %529 = vmatprep.mubr.f32.mxu0 0.0
          %530 = vmatmul.mubr.f32.gmra.mrb[0].mxu0 %v400
          %v531 = vpop.f32.mrb[0].mxu0
          %v532 = vadd.f32 %v369, %v531
          %v533 = vpop.f32.mrb[0].mxu0
          %534 = vmatprep.mubr.f32.mxu0 0.0
          %535 = vmatmul.mubr.f32.gmra.mrb[0].mxu0 %v403
          %v536 = vpop.f32.mrb[0].mxu0
          %v537 = vadd.f32 %v369, %v536
          %v538 = vpop.f32.mrb[0].mxu0
          %539 = vmatprep.mubr.f32.mxu0 0.0
          %540 = vmatmul.mubr.f32.gmra.mrb[0].mxu0 %v406
          %v541 = vpop.f32.mrb[0].mxu0
          %v542 = vadd.f32 %v369, %v541
          %v543 = vpop.f32.mrb[0].mxu0
          %544 = vmatprep.mubr.f32.mxu0 0.0
          %545 = vmatmul.mubr.f32.gmra.mrb[0].mxu0 %v409
          %v546 = vpop.f32.mrb[0].mxu0
          %v547 = vadd.f32 %v369, %v546
          %v548 = vpop.f32.mrb[0].mxu0
          %549 = vmatprep.mubr.f32.mxu0 0.0
          %550 = vmatmul.mubr.f32.gmra.mrb[0].mxu0 %v412
          %v551 = vpop.f32.mrb[0].mxu0
          %v552 = vadd.f32 %v369, %v551
          %v553 = vpop.f32.mrb[0].mxu0
          %554 = vmatprep.mubr.f32.mxu0 0.0
          %555 = vmatmul.mubr.f32.gmra.mrb[0].mxu0 %v415
          %v556 = vpop.f32.mrb[0].mxu0
          %v557 = vadd.f32 %v369, %v556
          %v558 = vpop.f32.mrb[0].mxu0
          %559 = vmatprep.mubr.f32.mxu0 0.0
          %560 = vmatmul.mubr.f32.gmra.mrb[0].mxu0 %v418
          %v561 = vpop.f32.mrb[0].mxu0
          %v562 = vadd.f32 %v369, %v561
          %v563 = vpop.f32.mrb[0].mxu0
          %564 = vdwg.mxu0
          %v565 = vmax.f32 %v487, 0.0
          %v566 = vmax.f32 %v492, 0.0
          %v567 = vmax.f32 %v497, 0.0
          %v568 = vmax.f32 %v502, 0.0
          %v569 = vmax.f32 %v507, 0.0
          %v570 = vmax.f32 %v512, 0.0
          %v571 = vmax.f32 %v517, 0.0
          %v572 = vmax.f32 %v522, 0.0
          %v573 = vmax.f32 %v527, 0.0
          %v574 = vmax.f32 %v532, 0.0
          %v575 = vmax.f32 %v537, 0.0
          %v576 = vmax.f32 %v542, 0.0
          %v577 = vmax.f32 %v547, 0.0
          %v578 = vmax.f32 %v552, 0.0
          %v579 = vmax.f32 %v557, 0.0
          %v580 = vmax.f32 %v562, 0.0
          %s581 = scalar_lea.vmem [#allocation2], %s339
          %vm582 = vcmask 523264
          %583 = vst.msk [vmem:[%s581] sm:$0xff] %vm582, %v565
          %584 = vst.msk [vmem:[%s581 + $0x8] sm:$0xff] %vm582, %v566
          %585 = vst.msk [vmem:[%s581 + $0x10] sm:$0xff] %vm582, %v567
          %586 = vst.msk [vmem:[%s581 + $0x18] sm:$0xff] %vm582, %v568
          %587 = vst.msk [vmem:[%s581 + $0x20] sm:$0xff] %vm582, %v569
          %588 = vst.msk [vmem:[%s581 + $0x28] sm:$0xff] %vm582, %v570
          %589 = vst.msk [vmem:[%s581 + $0x30] sm:$0xff] %vm582, %v571
          %590 = vst.msk [vmem:[%s581 + $0x38] sm:$0xff] %vm582, %v572
          %591 = vst.msk [vmem:[%s581 + $0x40] sm:$0xff] %vm582, %v573
          %592 = vst.msk [vmem:[%s581 + $0x48] sm:$0xff] %vm582, %v574
          %593 = vst.msk [vmem:[%s581 + $0x50] sm:$0xff] %vm582, %v575
          %594 = vst.msk [vmem:[%s581 + $0x58] sm:$0xff] %vm582, %v576
          %595 = vst.msk [vmem:[%s581 + $0x60] sm:$0xff] %vm582, %v577
          %596 = vst.msk [vmem:[%s581 + $0x68] sm:$0xff] %vm582, %v578
          %597 = vst.msk [vmem:[%s581 + $0x70] sm:$0xff] %vm582, %v579
          %598 = vst.msk [vmem:[%s581 + $0x78] sm:$0xff] %vm582, %v580
          %v599 = vmul.f32 %v565, 0.1
          %v600 = vmul.f32 %v566, 0.1
          %v601 = vmul.f32 %v567, 0.1
          %v602 = vmul.f32 %v568, 0.1
          %v603 = vmul.f32 %v569, 0.1
          %v604 = vmul.f32 %v570, 0.1
          %v605 = vmul.f32 %v571, 0.1
          %v606 = vmul.f32 %v572, 0.1
          %v607 = vmul.f32 %v573, 0.1
          %v608 = vmul.f32 %v574, 0.1
          %v609 = vmul.f32 %v575, 0.1
          %v610 = vmul.f32 %v576, 0.1
          %v611 = vmul.f32 %v577, 0.1
          %v612 = vmul.f32 %v578, 0.1
          %v613 = vmul.f32 %v579, 0.1
          %v614 = vmul.f32 %v580, 0.1
          %s615 = scalar_lea.vmem [#allocation4], %s339
          %616 = vst.msk [vmem:[%s615] sm:$0xff] %vm582, %v599
          %617 = vst.msk [vmem:[%s615 + $0x8] sm:$0xff] %vm582, %v600
          %618 = vst.msk [vmem:[%s615 + $0x10] sm:$0xff] %vm582, %v601
          %619 = vst.msk [vmem:[%s615 + $0x18] sm:$0xff] %vm582, %v602
          %620 = vst.msk [vmem:[%s615 + $0x20] sm:$0xff] %vm582, %v603
          %621 = vst.msk [vmem:[%s615 + $0x28] sm:$0xff] %vm582, %v604
          %622 = vst.msk [vmem:[%s615 + $0x30] sm:$0xff] %vm582, %v605
          %623 = vst.msk [vmem:[%s615 + $0x38] sm:$0xff] %vm582, %v606
          %624 = vst.msk [vmem:[%s615 + $0x40] sm:$0xff] %vm582, %v607
          %625 = vst.msk [vmem:[%s615 + $0x48] sm:$0xff] %vm582, %v608
          %626 = vst.msk [vmem:[%s615 + $0x50] sm:$0xff] %vm582, %v609
          %627 = vst.msk [vmem:[%s615 + $0x58] sm:$0xff] %vm582, %v610
          %628 = vst.msk [vmem:[%s615 + $0x60] sm:$0xff] %vm582, %v611
          %629 = vst.msk [vmem:[%s615 + $0x68] sm:$0xff] %vm582, %v612
          %630 = vst.msk [vmem:[%s615 + $0x70] sm:$0xff] %vm582, %v613
          %631 = vst.msk [vmem:[%s615 + $0x78] sm:$0xff] %vm582, %v614
        $region52: #{tpu_custom_call.1} parent=43 // pred_fallthru
          _
        %p632 = scmp.lt.s32.totalorder %s25, 0
        %s633 = ssub.s32 0, %s25
        %s634 = scalar_select %p632, %s633, %s25
        %s635 = sand.u32 %s634, 1
        %s636 = ssub.s32 0, %s635
        %s637 = scalar_select %p632, %s636, %s635
        %p638 = scmp.ne.s32.totalorder %s637, 0
        %p639 = scmp.lt.s32.totalorder %s637, 0
        %p640 = pnand %p639, %p638
        %p641 = pneg %p640
        %s642 = sadd.s32 %s637, 2
        %s643 = scalar_select %p641, %s642, %s637
        %p644 = scmp.eq.s32.totalorder %s643, 1
        // Predicated region
        $region53: #{tpu_custom_call.1} parent=43 // pred_check
          %p645 = pneg %p644
        $region54: #{tpu_custom_call.1} parent=43 // pred_check_branch
          %647 = sbr.rel (%p645) target = $region56
        $region55: #{tpu_custom_call.1} parent=43 // pred_region
          %v648 = vld [vmem:[%s332] sm:$0xff]
          %v649 = vld [vmem:[%s332 + $0x8] sm:$0xff]
          %v650 = vld [vmem:[%s332 + $0x10] sm:$0xff]
          %v651 = vld [vmem:[%s332 + $0x18] sm:$0xff]
          %v652 = vld [vmem:[%s332 + $0x20] sm:$0xff]
          %v653 = vld [vmem:[%s332 + $0x28] sm:$0xff]
          %v654 = vld [vmem:[%s332 + $0x30] sm:$0xff]
          %v655 = vld [vmem:[%s332 + $0x38] sm:$0xff]
          %v656 = vld [vmem:[%s332 + $0x40] sm:$0xff]
          %v657 = vld [vmem:[%s332 + $0x48] sm:$0xff]
          %v658 = vld [vmem:[%s332 + $0x50] sm:$0xff]
          %v659 = vld [vmem:[%s332 + $0x58] sm:$0xff]
          %v660 = vld [vmem:[%s332 + $0x60] sm:$0xff]
          %v661 = vld [vmem:[%s332 + $0x68] sm:$0xff]
          %v662 = vld [vmem:[%s332 + $0x70] sm:$0xff]
          %v663 = vld [vmem:[%s332 + $0x78] sm:$0xff]
          %v664 = vunpack.c.l.bf16 %v648
          %v665 = vunpack.c.h.bf16 %v648
          %v666 = vunpack.c.l.bf16 %v649
          %v667 = vunpack.c.h.bf16 %v649
          %v668 = vunpack.c.l.bf16 %v650
          %v669 = vunpack.c.h.bf16 %v650
          %v670 = vunpack.c.l.bf16 %v651
          %v671 = vunpack.c.h.bf16 %v651
          %v672 = vunpack.c.l.bf16 %v652
          %v673 = vunpack.c.h.bf16 %v652
          %v674 = vunpack.c.l.bf16 %v653
          %v675 = vunpack.c.h.bf16 %v653
          %v676 = vunpack.c.l.bf16 %v654
          %v677 = vunpack.c.h.bf16 %v654
          %v678 = vunpack.c.l.bf16 %v655
          %v679 = vunpack.c.h.bf16 %v655
          %v680 = vunpack.c.l.bf16 %v656
          %v681 = vunpack.c.h.bf16 %v656
          %v682 = vunpack.c.l.bf16 %v657
          %v683 = vunpack.c.h.bf16 %v657
          %v684 = vunpack.c.l.bf16 %v658
          %v685 = vunpack.c.h.bf16 %v658
          %v686 = vunpack.c.l.bf16 %v659
          %v687 = vunpack.c.h.bf16 %v659
          %v688 = vunpack.c.l.bf16 %v660
          %v689 = vunpack.c.h.bf16 %v660
          %v690 = vunpack.c.l.bf16 %v661
          %v691 = vunpack.c.h.bf16 %v661
          %v692 = vunpack.c.l.bf16 %v662
          %v693 = vunpack.c.h.bf16 %v662
          %v694 = vunpack.c.l.bf16 %v663
          %v695 = vunpack.c.h.bf16 %v663
          %v696 = vld [vmem:[#allocation2] sm:$0xff]
          %v697 = vld [vmem:[#allocation2 + $0x8] sm:$0xff]
          %v698 = vld [vmem:[#allocation2 + $0x10] sm:$0xff]
          %v699 = vld [vmem:[#allocation2 + $0x18] sm:$0xff]
          %v700 = vld [vmem:[#allocation2 + $0x20] sm:$0xff]
          %v701 = vld [vmem:[#allocation2 + $0x28] sm:$0xff]
          %v702 = vld [vmem:[#allocation2 + $0x30] sm:$0xff]
          %v703 = vld [vmem:[#allocation2 + $0x38] sm:$0xff]
          %v704 = vld [vmem:[#allocation2 + $0x40] sm:$0xff]
          %v705 = vld [vmem:[#allocation2 + $0x48] sm:$0xff]
          %v706 = vld [vmem:[#allocation2 + $0x50] sm:$0xff]
          %v707 = vld [vmem:[#allocation2 + $0x58] sm:$0xff]
          %v708 = vld [vmem:[#allocation2 + $0x60] sm:$0xff]
          %v709 = vld [vmem:[#allocation2 + $0x68] sm:$0xff]
          %v710 = vld [vmem:[#allocation2 + $0x70] sm:$0xff]
          %v711 = vld [vmem:[#allocation2 + $0x78] sm:$0xff]
          %v712 = vld [vmem:[#allocation2 + $0x80] sm:$0xff]
          %v713 = vld [vmem:[#allocation2 + $0x88] sm:$0xff]
          %v714 = vld [vmem:[#allocation2 + $0x90] sm:$0xff]
          %v715 = vld [vmem:[#allocation2 + $0x98] sm:$0xff]
          %v716 = vld [vmem:[#allocation2 + $0xa0] sm:$0xff]
          %v717 = vld [vmem:[#allocation2 + $0xa8] sm:$0xff]
          %v718 = vld [vmem:[#allocation2 + $0xb0] sm:$0xff]
          %v719 = vld [vmem:[#allocation2 + $0xb8] sm:$0xff]
          %v720 = vld [vmem:[#allocation2 + $0xc0] sm:$0xff]
          %v721 = vld [vmem:[#allocation2 + $0xc8] sm:$0xff]
          %v722 = vld [vmem:[#allocation2 + $0xd0] sm:$0xff]
          %v723 = vld [vmem:[#allocation2 + $0xd8] sm:$0xff]
          %v724 = vld [vmem:[#allocation2 + $0xe0] sm:$0xff]
          %v725 = vld [vmem:[#allocation2 + $0xe8] sm:$0xff]
          %v726 = vld [vmem:[#allocation2 + $0xf0] sm:$0xff]
          %v727 = vld [vmem:[#allocation2 + $0xf8] sm:$0xff]
          %s728 = scalar_lea.vmem [#allocation4], %s339
          %v729 = vld [vmem:[%s728] sm:$0xff]
          %v730 = vld [vmem:[%s728 + $0x8] sm:$0xff]
          %v731 = vld [vmem:[%s728 + $0x10] sm:$0xff]
          %v732 = vld [vmem:[%s728 + $0x18] sm:$0xff]
          %v733 = vld [vmem:[%s728 + $0x20] sm:$0xff]
          %v734 = vld [vmem:[%s728 + $0x28] sm:$0xff]
          %v735 = vld [vmem:[%s728 + $0x30] sm:$0xff]
          %v736 = vld [vmem:[%s728 + $0x38] sm:$0xff]
          %v737 = vld [vmem:[%s728 + $0x40] sm:$0xff]
          %v738 = vld [vmem:[%s728 + $0x48] sm:$0xff]
          %v739 = vld [vmem:[%s728 + $0x50] sm:$0xff]
          %v740 = vld [vmem:[%s728 + $0x58] sm:$0xff]
          %v741 = vld [vmem:[%s728 + $0x60] sm:$0xff]
          %v742 = vld [vmem:[%s728 + $0x68] sm:$0xff]
          %v743 = vld [vmem:[%s728 + $0x70] sm:$0xff]
          %v744 = vld [vmem:[%s728 + $0x78] sm:$0xff]
          %745 = vmatprep.subr.mxu0 0.0
          %746 = vmatpush1.msra.mxu0 %v696
          %747 = vmatprep.subr.mxu0 0.0
          %748 = vmatpush1.msra.mxu0 %v697
          %749 = vmatprep.subr.mxu0 0.0
          %750 = vmatpush1.msra.mxu0 %v698
          %751 = vmatprep.subr.mxu0 0.0
          %752 = vmatpush1.msra.mxu0 %v699
          %753 = vmatprep.subr.mxu0 0.0
          %754 = vmatpush1.msra.mxu0 %v700
          %755 = vmatprep.subr.mxu0 0.0
          %756 = vmatpush1.msra.mxu0 %v701
          %757 = vmatprep.subr.mxu0 0.0
          %758 = vmatpush1.msra.mxu0 %v702
          %759 = vmatprep.subr.mxu0 0.0
          %760 = vmatpush1.msra.mxu0 %v703
          %761 = vmatprep.subr.mxu0 0.0
          %762 = vmatpush1.msra.mxu0 %v704
          %763 = vmatprep.subr.mxu0 0.0
          %764 = vmatpush1.msra.mxu0 %v705
          %765 = vmatprep.subr.mxu0 0.0
          %766 = vmatpush1.msra.mxu0 %v706
          %767 = vmatprep.subr.mxu0 0.0
          %768 = vmatpush1.msra.mxu0 %v707
          %769 = vmatprep.subr.mxu0 0.0
          %770 = vmatpush1.msra.mxu0 %v708
          %771 = vmatprep.subr.mxu0 0.0
          %772 = vmatpush1.msra.mxu0 %v709
          %773 = vmatprep.subr.mxu0 0.0
          %774 = vmatpush1.msra.mxu0 %v710
          %775 = vmatprep.subr.mxu0 0.0
          %776 = vmatpush1.msra.mxu0 %v711
          %777 = vmatprep.subr.mxu0 0.0
          %778 = vmatpush1.msra.mxu0 %v712
          %779 = vmatprep.subr.mxu0 0.0
          %780 = vmatpush1.msra.mxu0 %v713
          %781 = vmatprep.subr.mxu0 0.0
          %782 = vmatpush1.msra.mxu0 %v714
          %783 = vmatprep.subr.mxu0 0.0
          %784 = vmatpush1.msra.mxu0 %v715
          %785 = vmatprep.subr.mxu0 0.0
          %786 = vmatpush1.msra.mxu0 %v716
          %787 = vmatprep.subr.mxu0 0.0
          %788 = vmatpush1.msra.mxu0 %v717
          %789 = vmatprep.subr.mxu0 0.0
          %790 = vmatpush1.msra.mxu0 %v718
          %791 = vmatprep.subr.mxu0 0.0
          %792 = vmatpush1.msra.mxu0 %v719
          %793 = vmatprep.subr.mxu0 0.0
          %794 = vmatpush1.msra.mxu0 %v720
          %795 = vmatprep.subr.mxu0 0.0
          %796 = vmatpush1.msra.mxu0 %v721
          %797 = vmatprep.subr.mxu0 0.0
          %798 = vmatpush1.msra.mxu0 %v722
          %799 = vmatprep.subr.mxu0 0.0
          %800 = vmatpush1.msra.mxu0 %v723
          %801 = vmatprep.subr.mxu0 0.0
          %802 = vmatpush1.msra.mxu0 %v724
          %803 = vmatprep.subr.mxu0 0.0
          %804 = vmatpush1.msra.mxu0 %v725
          %805 = vmatprep.subr.mxu0 0.0
          %806 = vmatpush1.msra.mxu0 %v726
          %807 = vmatprep.subr.mxu0 0.0
          %808 = vmatpush1.msra.mxu0 %v727
          %809 = vmatprep.mubr.f32.mxu0 %v665
          %810 = vmatmul.mubr.f32.gmra.mrb[0].mxu0 %v664
          %v811 = vpop.f32.mrb[0].mxu0
          %v812 = vadd.f32 %v729, %v811
          %v813 = vpop.f32.mrb[0].mxu0
          %814 = vmatprep.mubr.f32.mxu0 %v667
          %815 = vmatmul.mubr.f32.gmra.mrb[0].mxu0 %v666
          %v816 = vpop.f32.mrb[0].mxu0
          %v817 = vadd.f32 %v730, %v816
          %v818 = vpop.f32.mrb[0].mxu0
          %819 = vmatprep.mubr.f32.mxu0 %v669
          %820 = vmatmul.mubr.f32.gmra.mrb[0].mxu0 %v668
          %v821 = vpop.f32.mrb[0].mxu0
          %v822 = vadd.f32 %v731, %v821
          %v823 = vpop.f32.mrb[0].mxu0
          %824 = vmatprep.mubr.f32.mxu0 %v671
          %825 = vmatmul.mubr.f32.gmra.mrb[0].mxu0 %v670
          %v826 = vpop.f32.mrb[0].mxu0
          %v827 = vadd.f32 %v732, %v826
          %v828 = vpop.f32.mrb[0].mxu0
          %829 = vmatprep.mubr.f32.mxu0 %v673
          %830 = vmatmul.mubr.f32.gmra.mrb[0].mxu0 %v672
          %v831 = vpop.f32.mrb[0].mxu0
          %v832 = vadd.f32 %v733, %v831
          %v833 = vpop.f32.mrb[0].mxu0
          %834 = vmatprep.mubr.f32.mxu0 %v675
          %835 = vmatmul.mubr.f32.gmra.mrb[0].mxu0 %v674
          %v836 = vpop.f32.mrb[0].mxu0
          %v837 = vadd.f32 %v734, %v836
          %v838 = vpop.f32.mrb[0].mxu0
          %839 = vmatprep.mubr.f32.mxu0 %v677
          %840 = vmatmul.mubr.f32.gmra.mrb[0].mxu0 %v676
          %v841 = vpop.f32.mrb[0].mxu0
          %v842 = vadd.f32 %v735, %v841
          %v843 = vpop.f32.mrb[0].mxu0
          %844 = vmatprep.mubr.f32.mxu0 %v679
          %845 = vmatmul.mubr.f32.gmra.mrb[0].mxu0 %v678
          %v846 = vpop.f32.mrb[0].mxu0
          %v847 = vadd.f32 %v736, %v846
          %v848 = vpop.f32.mrb[0].mxu0
          %849 = vmatprep.mubr.f32.mxu0 %v681
          %850 = vmatmul.mubr.f32.gmra.mrb[0].mxu0 %v680
          %v851 = vpop.f32.mrb[0].mxu0
          %v852 = vadd.f32 %v737, %v851
          %v853 = vpop.f32.mrb[0].mxu0
          %854 = vmatprep.mubr.f32.mxu0 %v683
          %855 = vmatmul.mubr.f32.gmra.mrb[0].mxu0 %v682
          %v856 = vpop.f32.mrb[0].mxu0
          %v857 = vadd.f32 %v738, %v856
          %v858 = vpop.f32.mrb[0].mxu0
          %859 = vmatprep.mubr.f32.mxu0 %v685
          %860 = vmatmul.mubr.f32.gmra.mrb[0].mxu0 %v684
          %v861 = vpop.f32.mrb[0].mxu0
          %v862 = vadd.f32 %v739, %v861
          %v863 = vpop.f32.mrb[0].mxu0
          %864 = vmatprep.mubr.f32.mxu0 %v687
          %865 = vmatmul.mubr.f32.gmra.mrb[0].mxu0 %v686
          %v866 = vpop.f32.mrb[0].mxu0
          %v867 = vadd.f32 %v740, %v866
          %v868 = vpop.f32.mrb[0].mxu0
          %869 = vmatprep.mubr.f32.mxu0 %v689
          %870 = vmatmul.mubr.f32.gmra.mrb[0].mxu0 %v688
          %v871 = vpop.f32.mrb[0].mxu0
          %v872 = vadd.f32 %v741, %v871
          %v873 = vpop.f32.mrb[0].mxu0
          %874 = vmatprep.mubr.f32.mxu0 %v691
          %875 = vmatmul.mubr.f32.gmra.mrb[0].mxu0 %v690
          %v876 = vpop.f32.mrb[0].mxu0
          %v877 = vadd.f32 %v742, %v876
          %v878 = vpop.f32.mrb[0].mxu0
          %879 = vmatprep.mubr.f32.mxu0 %v693
          %880 = vmatmul.mubr.f32.gmra.mrb[0].mxu0 %v692
          %v881 = vpop.f32.mrb[0].mxu0
          %v882 = vadd.f32 %v743, %v881
          %v883 = vpop.f32.mrb[0].mxu0
          %884 = vmatprep.mubr.f32.mxu0 %v695
          %885 = vmatmul.mubr.f32.gmra.mrb[0].mxu0 %v694
          %v886 = vpop.f32.mrb[0].mxu0
          %v887 = vadd.f32 %v744, %v886
          %v888 = vpop.f32.mrb[0].mxu0
          %889 = vdwg.mxu0
          %s890 = scalar_lea.vmem [#allocation3], %s339
          %vm891 = vcmask 523264
          %892 = vst.msk [vmem:[%s890] sm:$0xff] %vm891, %v812
          %893 = vst.msk [vmem:[%s890 + $0x8] sm:$0xff] %vm891, %v817
          %894 = vst.msk [vmem:[%s890 + $0x10] sm:$0xff] %vm891, %v822
          %895 = vst.msk [vmem:[%s890 + $0x18] sm:$0xff] %vm891, %v827
          %896 = vst.msk [vmem:[%s890 + $0x20] sm:$0xff] %vm891, %v832
          %897 = vst.msk [vmem:[%s890 + $0x28] sm:$0xff] %vm891, %v837
          %898 = vst.msk [vmem:[%s890 + $0x30] sm:$0xff] %vm891, %v842
          %899 = vst.msk [vmem:[%s890 + $0x38] sm:$0xff] %vm891, %v847
          %900 = vst.msk [vmem:[%s890 + $0x40] sm:$0xff] %vm891, %v852
          %901 = vst.msk [vmem:[%s890 + $0x48] sm:$0xff] %vm891, %v857
          %902 = vst.msk [vmem:[%s890 + $0x50] sm:$0xff] %vm891, %v862
          %903 = vst.msk [vmem:[%s890 + $0x58] sm:$0xff] %vm891, %v867
          %904 = vst.msk [vmem:[%s890 + $0x60] sm:$0xff] %vm891, %v872
          %905 = vst.msk [vmem:[%s890 + $0x68] sm:$0xff] %vm891, %v877
          %906 = vst.msk [vmem:[%s890 + $0x70] sm:$0xff] %vm891, %v882
          %907 = vst.msk [vmem:[%s890 + $0x78] sm:$0xff] %vm891, %v887
          %p908 = scmp.eq.s32.totalorder %s25, 10
          // Predicated region
          $region57: #{tpu_custom_call.1} parent=55 // pred_check
            %p909 = pneg %p908
          $region58: #{tpu_custom_call.1} parent=55 // pred_check_branch
            %911 = sbr.rel (%p909) target = $region60
          $region59: #{tpu_custom_call.1} parent=55 // pred_region
            %v912 = vld [vmem:[%s4] sm:$0xff]
            %v913 = vld [vmem:[%s4 + $0x8] sm:$0xff]
            %v914 = vld [vmem:[%s4 + $0x10] sm:$0xff]
            %v915 = vld [vmem:[%s4 + $0x18] sm:$0xff]
            %v916 = vld [vmem:[%s4 + $0x20] sm:$0xff]
            %v917 = vld [vmem:[%s4 + $0x28] sm:$0xff]
            %v918 = vld [vmem:[%s4 + $0x30] sm:$0xff]
            %v919 = vld [vmem:[%s4 + $0x38] sm:$0xff]
            %v920 = vld [vmem:[%s5] sm:$0x1]
            %v922 = vlaneseq
            %v923 = vshrl.u32 %v922, 7
            %v924 = vsub.s32 0, %v923
            %v925 = vrot.slane %v920, %v924
            %v928 = vsel %vm891, %v812, 0
            %v931 = vsel %vm891, %v817, 0
            %v934 = vsel %vm891, %v822, 0
            %v937 = vsel %vm891, %v827, 0
            %v940 = vsel %vm891, %v832, 0
            %v943 = vsel %vm891, %v837, 0
            %v946 = vsel %vm891, %v842, 0
            %v949 = vsel %vm891, %v847, 0
            %v952 = vsel %vm891, %v852, 0
            %v955 = vsel %vm891, %v857, 0
            %v958 = vsel %vm891, %v862, 0
            %v961 = vsel %vm891, %v867, 0
            %v964 = vsel %vm891, %v872, 0
            %v967 = vsel %vm891, %v877, 0
            %v970 = vsel %vm891, %v882, 0
            %v973 = vsel %vm891, %v887, 0
            %975 = vmatprep.subr.mxu0 0.0
            %976 = vmatpush1.msra.mxu0 %v912
            %977 = vmatprep.subr.mxu0 0.0
            %978 = vmatpush1.msra.mxu0 %v913
            %979 = vmatprep.subr.mxu0 0.0
            %980 = vmatpush1.msra.mxu0 %v914
            %981 = vmatprep.subr.mxu0 0.0
            %982 = vmatpush1.msra.mxu0 %v915
            %983 = vmatprep.subr.mxu0 0.0
            %984 = vmatpush1.msra.mxu0 %v916
            %985 = vmatprep.subr.mxu0 0.0
            %986 = vmatpush1.msra.mxu0 %v917
            %987 = vmatprep.subr.mxu0 0.0
            %988 = vmatpush1.msra.mxu0 %v918
            %989 = vmatprep.subr.mxu0 0.0
            %990 = vmatpush1.msra.mxu0 %v919
            %991 = vmatprep.subr.mxu0 0.0
            %992 = vmatpush1.msra.mxu0 0.0
            %993 = vmatprep.subr.mxu0 0.0
            %994 = vmatpush1.msra.mxu0 0.0
            %995 = vmatprep.subr.mxu0 0.0
            %996 = vmatpush1.msra.mxu0 0.0
            %997 = vmatprep.subr.mxu0 0.0
            %998 = vmatpush1.msra.mxu0 0.0
            %999 = vmatprep.subr.mxu0 0.0
            %1000 = vmatpush1.msra.mxu0 0.0
            %1001 = vmatprep.subr.mxu0 0.0
            %1002 = vmatpush1.msra.mxu0 0.0
            %1003 = vmatprep.subr.mxu0 0.0
            %1004 = vmatpush1.msra.mxu0 0.0
            %1005 = vmatprep.subr.mxu0 0.0
            %1006 = vmatpush1.msra.mxu0 0.0
            %1007 = vmatprep.subr.mxu0 0.0
            %1008 = vmatpush1.msra.mxu0 0.0
            %1009 = vmatprep.subr.mxu0 0.0
            %1010 = vmatpush1.msra.mxu0 0.0
            %1011 = vmatprep.subr.mxu0 0.0
            %1012 = vmatpush1.msra.mxu0 0.0
            %1013 = vmatprep.subr.mxu0 0.0
            %1014 = vmatpush1.msra.mxu0 0.0
            %1015 = vmatprep.subr.mxu0 0.0
            %1016 = vmatpush1.msra.mxu0 0.0
            %1017 = vmatprep.subr.mxu0 0.0
            %1018 = vmatpush1.msra.mxu0 0.0
            %1019 = vmatprep.subr.mxu0 0.0
            %1020 = vmatpush1.msra.mxu0 0.0
            %1021 = vmatprep.subr.mxu0 0.0
            %1022 = vmatpush1.msra.mxu0 0.0
            %1023 = vmatprep.subr.mxu0 0.0
            %1024 = vmatpush1.msra.mxu0 0.0
            %1025 = vmatprep.subr.mxu0 0.0
            %1026 = vmatpush1.msra.mxu0 0.0
            %1027 = vmatprep.subr.mxu0 0.0
            %1028 = vmatpush1.msra.mxu0 0.0
            %1029 = vmatprep.subr.mxu0 0.0
            %1030 = vmatpush1.msra.mxu0 0.0
            %1031 = vmatprep.subr.mxu0 0.0
            %1032 = vmatpush1.msra.mxu0 0.0
            %1033 = vmatprep.subr.mxu0 0.0
            %1034 = vmatpush1.msra.mxu0 0.0
            %1035 = vmatprep.subr.mxu0 0.0
            %1036 = vmatpush1.msra.mxu0 0.0
            %1037 = vmatprep.subr.mxu0 0.0
            %1038 = vmatpush1.msra.mxu0 0.0
            %1039 = vmatprep.mubr.f32.mxu0 0.0
            %1040 = vmatmul.mubr.f32.gmra.mrb[0].mxu0 %v928
            %v1041 = vpop.f32.mrb[0].mxu0
            %v1042 = vadd.f32 %v925, %v1041
            %v1043 = vpop.f32.mrb[0].mxu0
            %1044 = vmatprep.mubr.f32.mxu0 0.0
            %1045 = vmatmul.mubr.f32.gmra.mrb[0].mxu0 %v931
            %v1046 = vpop.f32.mrb[0].mxu0
            %v1047 = vadd.f32 %v925, %v1046
            %v1048 = vpop.f32.mrb[0].mxu0
            %1049 = vmatprep.mubr.f32.mxu0 0.0
            %1050 = vmatmul.mubr.f32.gmra.mrb[0].mxu0 %v934
            %v1051 = vpop.f32.mrb[0].mxu0
            %v1052 = vadd.f32 %v925, %v1051
            %v1053 = vpop.f32.mrb[0].mxu0
            %1054 = vmatprep.mubr.f32.mxu0 0.0
            %1055 = vmatmul.mubr.f32.gmra.mrb[0].mxu0 %v937
            %v1056 = vpop.f32.mrb[0].mxu0
            %v1057 = vadd.f32 %v925, %v1056
            %v1058 = vpop.f32.mrb[0].mxu0
            %1059 = vmatprep.mubr.f32.mxu0 0.0
            %1060 = vmatmul.mubr.f32.gmra.mrb[0].mxu0 %v940
            %v1061 = vpop.f32.mrb[0].mxu0
            %v1062 = vadd.f32 %v925, %v1061
            %v1063 = vpop.f32.mrb[0].mxu0
            %1064 = vmatprep.mubr.f32.mxu0 0.0
            %1065 = vmatmul.mubr.f32.gmra.mrb[0].mxu0 %v943
            %v1066 = vpop.f32.mrb[0].mxu0
            %v1067 = vadd.f32 %v925, %v1066
            %v1068 = vpop.f32.mrb[0].mxu0
            %1069 = vmatprep.mubr.f32.mxu0 0.0
            %1070 = vmatmul.mubr.f32.gmra.mrb[0].mxu0 %v946
            %v1071 = vpop.f32.mrb[0].mxu0
            %v1072 = vadd.f32 %v925, %v1071
            %v1073 = vpop.f32.mrb[0].mxu0
            %1074 = vmatprep.mubr.f32.mxu0 0.0
            %1075 = vmatmul.mubr.f32.gmra.mrb[0].mxu0 %v949
            %v1076 = vpop.f32.mrb[0].mxu0
            %v1077 = vadd.f32 %v925, %v1076
            %v1078 = vpop.f32.mrb[0].mxu0
            %1079 = vmatprep.mubr.f32.mxu0 0.0
            %1080 = vmatmul.mubr.f32.gmra.mrb[0].mxu0 %v952
            %v1081 = vpop.f32.mrb[0].mxu0
            %v1082 = vadd.f32 %v925, %v1081
            %v1083 = vpop.f32.mrb[0].mxu0
            %1084 = vmatprep.mubr.f32.mxu0 0.0
            %1085 = vmatmul.mubr.f32.gmra.mrb[0].mxu0 %v955
            %v1086 = vpop.f32.mrb[0].mxu0
            %v1087 = vadd.f32 %v925, %v1086
            %v1088 = vpop.f32.mrb[0].mxu0
            %1089 = vmatprep.mubr.f32.mxu0 0.0
            %1090 = vmatmul.mubr.f32.gmra.mrb[0].mxu0 %v958
            %v1091 = vpop.f32.mrb[0].mxu0
            %v1092 = vadd.f32 %v925, %v1091
            %v1093 = vpop.f32.mrb[0].mxu0
            %1094 = vmatprep.mubr.f32.mxu0 0.0
            %1095 = vmatmul.mubr.f32.gmra.mrb[0].mxu0 %v961
            %v1096 = vpop.f32.mrb[0].mxu0
            %v1097 = vadd.f32 %v925, %v1096
            %v1098 = vpop.f32.mrb[0].mxu0
            %1099 = vmatprep.mubr.f32.mxu0 0.0
            %1100 = vmatmul.mubr.f32.gmra.mrb[0].mxu0 %v964
            %v1101 = vpop.f32.mrb[0].mxu0
            %v1102 = vadd.f32 %v925, %v1101
            %v1103 = vpop.f32.mrb[0].mxu0
            %1104 = vmatprep.mubr.f32.mxu0 0.0
            %1105 = vmatmul.mubr.f32.gmra.mrb[0].mxu0 %v967
            %v1106 = vpop.f32.mrb[0].mxu0
            %v1107 = vadd.f32 %v925, %v1106
            %v1108 = vpop.f32.mrb[0].mxu0
            %1109 = vmatprep.mubr.f32.mxu0 0.0
            %1110 = vmatmul.mubr.f32.gmra.mrb[0].mxu0 %v970
            %v1111 = vpop.f32.mrb[0].mxu0
            %v1112 = vadd.f32 %v925, %v1111
            %v1113 = vpop.f32.mrb[0].mxu0
            %1114 = vmatprep.mubr.f32.mxu0 0.0
            %1115 = vmatmul.mubr.f32.gmra.mrb[0].mxu0 %v973
            %v1116 = vpop.f32.mrb[0].mxu0
            %v1117 = vadd.f32 %v925, %v1116
            %v1118 = vpop.f32.mrb[0].mxu0
            %1119 = vdwg.mxu0
            %1120 = vst [vmem:[%s314] sm:$0xff] %v1042
            %1121 = vst [vmem:[%s314 + $0x8] sm:$0xff] %v1047
            %1122 = vst [vmem:[%s314 + $0x10] sm:$0xff] %v1052
            %1123 = vst [vmem:[%s314 + $0x18] sm:$0xff] %v1057
            %1124 = vst [vmem:[%s314 + $0x20] sm:$0xff] %v1062
            %1125 = vst [vmem:[%s314 + $0x28] sm:$0xff] %v1067
            %1126 = vst [vmem:[%s314 + $0x30] sm:$0xff] %v1072
            %1127 = vst [vmem:[%s314 + $0x38] sm:$0xff] %v1077
            %1128 = vst [vmem:[%s314 + $0x40] sm:$0xff] %v1082
            %1129 = vst [vmem:[%s314 + $0x48] sm:$0xff] %v1087
            %1130 = vst [vmem:[%s314 + $0x50] sm:$0xff] %v1092
            %1131 = vst [vmem:[%s314 + $0x58] sm:$0xff] %v1097
            %1132 = vst [vmem:[%s314 + $0x60] sm:$0xff] %v1102
            %1133 = vst [vmem:[%s314 + $0x68] sm:$0xff] %v1107
            %1134 = vst [vmem:[%s314 + $0x70] sm:$0xff] %v1112
            %1135 = vst [vmem:[%s314 + $0x78] sm:$0xff] %v1117
          $region60: #{tpu_custom_call.1} parent=55 // pred_fallthru
            _
        $region56: #{tpu_custom_call.1} parent=43 // pred_fallthru
          _
        %p1136 = scmp.gt.s32.totalorder %s25, 0
        %p1137 = scmp.eq.s32.totalorder %s643, 0
        %p1138 = pnand %p1136, %p1137
        %p1139 = pneg %p1138
        // Predicated region
        $region61: #{tpu_custom_call.1} parent=43 // pred_check
          _
        $region62: #{tpu_custom_call.1} parent=43 // pred_check_branch
          %1141 = sbr.rel (%p1138) target = $region64
        $region63: #{tpu_custom_call.1} parent=43 // pred_region
          %v1142 = vld [vmem:[%s332] sm:$0xff]
          %v1143 = vld [vmem:[%s332 + $0x8] sm:$0xff]
          %v1144 = vld [vmem:[%s332 + $0x10] sm:$0xff]
          %v1145 = vld [vmem:[%s332 + $0x18] sm:$0xff]
          %v1146 = vld [vmem:[%s332 + $0x20] sm:$0xff]
          %v1147 = vld [vmem:[%s332 + $0x28] sm:$0xff]
          %v1148 = vld [vmem:[%s332 + $0x30] sm:$0xff]
          %v1149 = vld [vmem:[%s332 + $0x38] sm:$0xff]
          %v1150 = vld [vmem:[%s332 + $0x40] sm:$0xff]
          %v1151 = vld [vmem:[%s332 + $0x48] sm:$0xff]
          %v1152 = vld [vmem:[%s332 + $0x50] sm:$0xff]
          %v1153 = vld [vmem:[%s332 + $0x58] sm:$0xff]
          %v1154 = vld [vmem:[%s332 + $0x60] sm:$0xff]
          %v1155 = vld [vmem:[%s332 + $0x68] sm:$0xff]
          %v1156 = vld [vmem:[%s332 + $0x70] sm:$0xff]
          %v1157 = vld [vmem:[%s332 + $0x78] sm:$0xff]
          %v1158 = vunpack.c.l.bf16 %v1142
          %v1159 = vunpack.c.h.bf16 %v1142
          %v1160 = vunpack.c.l.bf16 %v1143
          %v1161 = vunpack.c.h.bf16 %v1143
          %v1162 = vunpack.c.l.bf16 %v1144
          %v1163 = vunpack.c.h.bf16 %v1144
          %v1164 = vunpack.c.l.bf16 %v1145
          %v1165 = vunpack.c.h.bf16 %v1145
          %v1166 = vunpack.c.l.bf16 %v1146
          %v1167 = vunpack.c.h.bf16 %v1146
          %v1168 = vunpack.c.l.bf16 %v1147
          %v1169 = vunpack.c.h.bf16 %v1147
          %v1170 = vunpack.c.l.bf16 %v1148
          %v1171 = vunpack.c.h.bf16 %v1148
          %v1172 = vunpack.c.l.bf16 %v1149
          %v1173 = vunpack.c.h.bf16 %v1149
          %v1174 = vunpack.c.l.bf16 %v1150
          %v1175 = vunpack.c.h.bf16 %v1150
          %v1176 = vunpack.c.l.bf16 %v1151
          %v1177 = vunpack.c.h.bf16 %v1151
          %v1178 = vunpack.c.l.bf16 %v1152
          %v1179 = vunpack.c.h.bf16 %v1152
          %v1180 = vunpack.c.l.bf16 %v1153
          %v1181 = vunpack.c.h.bf16 %v1153
          %v1182 = vunpack.c.l.bf16 %v1154
          %v1183 = vunpack.c.h.bf16 %v1154
          %v1184 = vunpack.c.l.bf16 %v1155
          %v1185 = vunpack.c.h.bf16 %v1155
          %v1186 = vunpack.c.l.bf16 %v1156
          %v1187 = vunpack.c.h.bf16 %v1156
          %v1188 = vunpack.c.l.bf16 %v1157
          %v1189 = vunpack.c.h.bf16 %v1157
          %v1190 = vld [vmem:[#allocation3] sm:$0xff]
          %v1191 = vld [vmem:[#allocation3 + $0x8] sm:$0xff]
          %v1192 = vld [vmem:[#allocation3 + $0x10] sm:$0xff]
          %v1193 = vld [vmem:[#allocation3 + $0x18] sm:$0xff]
          %v1194 = vld [vmem:[#allocation3 + $0x20] sm:$0xff]
          %v1195 = vld [vmem:[#allocation3 + $0x28] sm:$0xff]
          %v1196 = vld [vmem:[#allocation3 + $0x30] sm:$0xff]
          %v1197 = vld [vmem:[#allocation3 + $0x38] sm:$0xff]
          %v1198 = vld [vmem:[#allocation3 + $0x40] sm:$0xff]
          %v1199 = vld [vmem:[#allocation3 + $0x48] sm:$0xff]
          %v1200 = vld [vmem:[#allocation3 + $0x50] sm:$0xff]
          %v1201 = vld [vmem:[#allocation3 + $0x58] sm:$0xff]
          %v1202 = vld [vmem:[#allocation3 + $0x60] sm:$0xff]
          %v1203 = vld [vmem:[#allocation3 + $0x68] sm:$0xff]
          %v1204 = vld [vmem:[#allocation3 + $0x70] sm:$0xff]
          %v1205 = vld [vmem:[#allocation3 + $0x78] sm:$0xff]
          %v1206 = vld [vmem:[#allocation3 + $0x80] sm:$0xff]
          %v1207 = vld [vmem:[#allocation3 + $0x88] sm:$0xff]
          %v1208 = vld [vmem:[#allocation3 + $0x90] sm:$0xff]
          %v1209 = vld [vmem:[#allocation3 + $0x98] sm:$0xff]
          %v1210 = vld [vmem:[#allocation3 + $0xa0] sm:$0xff]
          %v1211 = vld [vmem:[#allocation3 + $0xa8] sm:$0xff]
          %v1212 = vld [vmem:[#allocation3 + $0xb0] sm:$0xff]
          %v1213 = vld [vmem:[#allocation3 + $0xb8] sm:$0xff]
          %v1214 = vld [vmem:[#allocation3 + $0xc0] sm:$0xff]
          %v1215 = vld [vmem:[#allocation3 + $0xc8] sm:$0xff]
          %v1216 = vld [vmem:[#allocation3 + $0xd0] sm:$0xff]
          %v1217 = vld [vmem:[#allocation3 + $0xd8] sm:$0xff]
          %v1218 = vld [vmem:[#allocation3 + $0xe0] sm:$0xff]
          %v1219 = vld [vmem:[#allocation3 + $0xe8] sm:$0xff]
          %v1220 = vld [vmem:[#allocation3 + $0xf0] sm:$0xff]
          %v1221 = vld [vmem:[#allocation3 + $0xf8] sm:$0xff]
          %s1222 = scalar_lea.vmem [#allocation4], %s339
          %v1223 = vld [vmem:[%s1222] sm:$0xff]
          %v1224 = vld [vmem:[%s1222 + $0x8] sm:$0xff]
          %v1225 = vld [vmem:[%s1222 + $0x10] sm:$0xff]
          %v1226 = vld [vmem:[%s1222 + $0x18] sm:$0xff]
          %v1227 = vld [vmem:[%s1222 + $0x20] sm:$0xff]
          %v1228 = vld [vmem:[%s1222 + $0x28] sm:$0xff]
          %v1229 = vld [vmem:[%s1222 + $0x30] sm:$0xff]
          %v1230 = vld [vmem:[%s1222 + $0x38] sm:$0xff]
          %v1231 = vld [vmem:[%s1222 + $0x40] sm:$0xff]
          %v1232 = vld [vmem:[%s1222 + $0x48] sm:$0xff]
          %v1233 = vld [vmem:[%s1222 + $0x50] sm:$0xff]
          %v1234 = vld [vmem:[%s1222 + $0x58] sm:$0xff]
          %v1235 = vld [vmem:[%s1222 + $0x60] sm:$0xff]
          %v1236 = vld [vmem:[%s1222 + $0x68] sm:$0xff]
          %v1237 = vld [vmem:[%s1222 + $0x70] sm:$0xff]
          %v1238 = vld [vmem:[%s1222 + $0x78] sm:$0xff]
          %1239 = vmatprep.subr.mxu0 0.0
          %1240 = vmatpush1.msra.mxu0 %v1190
          %1241 = vmatprep.subr.mxu0 0.0
          %1242 = vmatpush1.msra.mxu0 %v1191
          %1243 = vmatprep.subr.mxu0 0.0
          %1244 = vmatpush1.msra.mxu0 %v1192
          %1245 = vmatprep.subr.mxu0 0.0
          %1246 = vmatpush1.msra.mxu0 %v1193
          %1247 = vmatprep.subr.mxu0 0.0
          %1248 = vmatpush1.msra.mxu0 %v1194
          %1249 = vmatprep.subr.mxu0 0.0
          %1250 = vmatpush1.msra.mxu0 %v1195
          %1251 = vmatprep.subr.mxu0 0.0
          %1252 = vmatpush1.msra.mxu0 %v1196
          %1253 = vmatprep.subr.mxu0 0.0
          %1254 = vmatpush1.msra.mxu0 %v1197
          %1255 = vmatprep.subr.mxu0 0.0
          %1256 = vmatpush1.msra.mxu0 %v1198
          %1257 = vmatprep.subr.mxu0 0.0
          %1258 = vmatpush1.msra.mxu0 %v1199
          %1259 = vmatprep.subr.mxu0 0.0
          %1260 = vmatpush1.msra.mxu0 %v1200
          %1261 = vmatprep.subr.mxu0 0.0
          %1262 = vmatpush1.msra.mxu0 %v1201
          %1263 = vmatprep.subr.mxu0 0.0
          %1264 = vmatpush1.msra.mxu0 %v1202
          %1265 = vmatprep.subr.mxu0 0.0
          %1266 = vmatpush1.msra.mxu0 %v1203
          %1267 = vmatprep.subr.mxu0 0.0
          %1268 = vmatpush1.msra.mxu0 %v1204
          %1269 = vmatprep.subr.mxu0 0.0
          %1270 = vmatpush1.msra.mxu0 %v1205
          %1271 = vmatprep.subr.mxu0 0.0
          %1272 = vmatpush1.msra.mxu0 %v1206
          %1273 = vmatprep.subr.mxu0 0.0
          %1274 = vmatpush1.msra.mxu0 %v1207
          %1275 = vmatprep.subr.mxu0 0.0
          %1276 = vmatpush1.msra.mxu0 %v1208
          %1277 = vmatprep.subr.mxu0 0.0
          %1278 = vmatpush1.msra.mxu0 %v1209
          %1279 = vmatprep.subr.mxu0 0.0
          %1280 = vmatpush1.msra.mxu0 %v1210
          %1281 = vmatprep.subr.mxu0 0.0
          %1282 = vmatpush1.msra.mxu0 %v1211
          %1283 = vmatprep.subr.mxu0 0.0
          %1284 = vmatpush1.msra.mxu0 %v1212
          %1285 = vmatprep.subr.mxu0 0.0
          %1286 = vmatpush1.msra.mxu0 %v1213
          %1287 = vmatprep.subr.mxu0 0.0
          %1288 = vmatpush1.msra.mxu0 %v1214
          %1289 = vmatprep.subr.mxu0 0.0
          %1290 = vmatpush1.msra.mxu0 %v1215
          %1291 = vmatprep.subr.mxu0 0.0
          %1292 = vmatpush1.msra.mxu0 %v1216
          %1293 = vmatprep.subr.mxu0 0.0
          %1294 = vmatpush1.msra.mxu0 %v1217
          %1295 = vmatprep.subr.mxu0 0.0
          %1296 = vmatpush1.msra.mxu0 %v1218
          %1297 = vmatprep.subr.mxu0 0.0
          %1298 = vmatpush1.msra.mxu0 %v1219
          %1299 = vmatprep.subr.mxu0 0.0
          %1300 = vmatpush1.msra.mxu0 %v1220
          %1301 = vmatprep.subr.mxu0 0.0
          %1302 = vmatpush1.msra.mxu0 %v1221
          %1303 = vmatprep.mubr.f32.mxu0 %v1159
          %1304 = vmatmul.mubr.f32.gmra.mrb[0].mxu0 %v1158
          %v1305 = vpop.f32.mrb[0].mxu0
          %v1306 = vadd.f32 %v1223, %v1305
          %v1307 = vpop.f32.mrb[0].mxu0
          %1308 = vmatprep.mubr.f32.mxu0 %v1161
          %1309 = vmatmul.mubr.f32.gmra.mrb[0].mxu0 %v1160
          %v1310 = vpop.f32.mrb[0].mxu0
          %v1311 = vadd.f32 %v1224, %v1310
          %v1312 = vpop.f32.mrb[0].mxu0
          %1313 = vmatprep.mubr.f32.mxu0 %v1163
          %1314 = vmatmul.mubr.f32.gmra.mrb[0].mxu0 %v1162
          %v1315 = vpop.f32.mrb[0].mxu0
          %v1316 = vadd.f32 %v1225, %v1315
          %v1317 = vpop.f32.mrb[0].mxu0
          %1318 = vmatprep.mubr.f32.mxu0 %v1165
          %1319 = vmatmul.mubr.f32.gmra.mrb[0].mxu0 %v1164
          %v1320 = vpop.f32.mrb[0].mxu0
          %v1321 = vadd.f32 %v1226, %v1320
          %v1322 = vpop.f32.mrb[0].mxu0
          %1323 = vmatprep.mubr.f32.mxu0 %v1167
          %1324 = vmatmul.mubr.f32.gmra.mrb[0].mxu0 %v1166
          %v1325 = vpop.f32.mrb[0].mxu0
          %v1326 = vadd.f32 %v1227, %v1325
          %v1327 = vpop.f32.mrb[0].mxu0
          %1328 = vmatprep.mubr.f32.mxu0 %v1169
          %1329 = vmatmul.mubr.f32.gmra.mrb[0].mxu0 %v1168
          %v1330 = vpop.f32.mrb[0].mxu0
          %v1331 = vadd.f32 %v1228, %v1330
          %v1332 = vpop.f32.mrb[0].mxu0
          %1333 = vmatprep.mubr.f32.mxu0 %v1171
          %1334 = vmatmul.mubr.f32.gmra.mrb[0].mxu0 %v1170
          %v1335 = vpop.f32.mrb[0].mxu0
          %v1336 = vadd.f32 %v1229, %v1335
          %v1337 = vpop.f32.mrb[0].mxu0
          %1338 = vmatprep.mubr.f32.mxu0 %v1173
          %1339 = vmatmul.mubr.f32.gmra.mrb[0].mxu0 %v1172
          %v1340 = vpop.f32.mrb[0].mxu0
          %v1341 = vadd.f32 %v1230, %v1340
          %v1342 = vpop.f32.mrb[0].mxu0
          %1343 = vmatprep.mubr.f32.mxu0 %v1175
          %1344 = vmatmul.mubr.f32.gmra.mrb[0].mxu0 %v1174
          %v1345 = vpop.f32.mrb[0].mxu0
          %v1346 = vadd.f32 %v1231, %v1345
          %v1347 = vpop.f32.mrb[0].mxu0
          %1348 = vmatprep.mubr.f32.mxu0 %v1177
          %1349 = vmatmul.mubr.f32.gmra.mrb[0].mxu0 %v1176
          %v1350 = vpop.f32.mrb[0].mxu0
          %v1351 = vadd.f32 %v1232, %v1350
          %v1352 = vpop.f32.mrb[0].mxu0
          %1353 = vmatprep.mubr.f32.mxu0 %v1179
          %1354 = vmatmul.mubr.f32.gmra.mrb[0].mxu0 %v1178
          %v1355 = vpop.f32.mrb[0].mxu0
          %v1356 = vadd.f32 %v1233, %v1355
          %v1357 = vpop.f32.mrb[0].mxu0
          %1358 = vmatprep.mubr.f32.mxu0 %v1181
          %1359 = vmatmul.mubr.f32.gmra.mrb[0].mxu0 %v1180
          %v1360 = vpop.f32.mrb[0].mxu0
          %v1361 = vadd.f32 %v1234, %v1360
          %v1362 = vpop.f32.mrb[0].mxu0
          %1363 = vmatprep.mubr.f32.mxu0 %v1183
          %1364 = vmatmul.mubr.f32.gmra.mrb[0].mxu0 %v1182
          %v1365 = vpop.f32.mrb[0].mxu0
          %v1366 = vadd.f32 %v1235, %v1365
          %v1367 = vpop.f32.mrb[0].mxu0
          %1368 = vmatprep.mubr.f32.mxu0 %v1185
          %1369 = vmatmul.mubr.f32.gmra.mrb[0].mxu0 %v1184
          %v1370 = vpop.f32.mrb[0].mxu0
          %v1371 = vadd.f32 %v1236, %v1370
          %v1372 = vpop.f32.mrb[0].mxu0
          %1373 = vmatprep.mubr.f32.mxu0 %v1187
          %1374 = vmatmul.mubr.f32.gmra.mrb[0].mxu0 %v1186
          %v1375 = vpop.f32.mrb[0].mxu0
          %v1376 = vadd.f32 %v1237, %v1375
          %v1377 = vpop.f32.mrb[0].mxu0
          %1378 = vmatprep.mubr.f32.mxu0 %v1189
          %1379 = vmatmul.mubr.f32.gmra.mrb[0].mxu0 %v1188
          %v1380 = vpop.f32.mrb[0].mxu0
          %v1381 = vadd.f32 %v1238, %v1380
          %v1382 = vpop.f32.mrb[0].mxu0
          %1383 = vdwg.mxu0
          %s1384 = scalar_lea.vmem [#allocation2], %s339
          %vm1385 = vcmask 523264
          %1386 = vst.msk [vmem:[%s1384] sm:$0xff] %vm1385, %v1306
          %1387 = vst.msk [vmem:[%s1384 + $0x8] sm:$0xff] %vm1385, %v1311
          %1388 = vst.msk [vmem:[%s1384 + $0x10] sm:$0xff] %vm1385, %v1316
          %1389 = vst.msk [vmem:[%s1384 + $0x18] sm:$0xff] %vm1385, %v1321
          %1390 = vst.msk [vmem:[%s1384 + $0x20] sm:$0xff] %vm1385, %v1326
          %1391 = vst.msk [vmem:[%s1384 + $0x28] sm:$0xff] %vm1385, %v1331
          %1392 = vst.msk [vmem:[%s1384 + $0x30] sm:$0xff] %vm1385, %v1336
          %1393 = vst.msk [vmem:[%s1384 + $0x38] sm:$0xff] %vm1385, %v1341
          %1394 = vst.msk [vmem:[%s1384 + $0x40] sm:$0xff] %vm1385, %v1346
          %1395 = vst.msk [vmem:[%s1384 + $0x48] sm:$0xff] %vm1385, %v1351
          %1396 = vst.msk [vmem:[%s1384 + $0x50] sm:$0xff] %vm1385, %v1356
          %1397 = vst.msk [vmem:[%s1384 + $0x58] sm:$0xff] %vm1385, %v1361
          %1398 = vst.msk [vmem:[%s1384 + $0x60] sm:$0xff] %vm1385, %v1366
          %1399 = vst.msk [vmem:[%s1384 + $0x68] sm:$0xff] %vm1385, %v1371
          %1400 = vst.msk [vmem:[%s1384 + $0x70] sm:$0xff] %vm1385, %v1376
          %1401 = vst.msk [vmem:[%s1384 + $0x78] sm:$0xff] %vm1385, %v1381
          %p1402 = scmp.eq.s32.totalorder %s25, 10
          // Predicated region
          $region65: #{tpu_custom_call.1} parent=63 // pred_check
            %p1403 = pneg %p1402
          $region66: #{tpu_custom_call.1} parent=63 // pred_check_branch
            %1405 = sbr.rel (%p1403) target = $region68
          $region67: #{tpu_custom_call.1} parent=63 // pred_region
            %v1406 = vld [vmem:[%s4] sm:$0xff]
            %v1407 = vld [vmem:[%s4 + $0x8] sm:$0xff]
            %v1408 = vld [vmem:[%s4 + $0x10] sm:$0xff]
            %v1409 = vld [vmem:[%s4 + $0x18] sm:$0xff]
            %v1410 = vld [vmem:[%s4 + $0x20] sm:$0xff]
            %v1411 = vld [vmem:[%s4 + $0x28] sm:$0xff]
            %v1412 = vld [vmem:[%s4 + $0x30] sm:$0xff]
            %v1413 = vld [vmem:[%s4 + $0x38] sm:$0xff]
            %v1414 = vld [vmem:[%s5] sm:$0x1]
            %v1416 = vlaneseq
            %v1417 = vshrl.u32 %v1416, 7
            %v1418 = vsub.s32 0, %v1417
            %v1419 = vrot.slane %v1414, %v1418
            %v1422 = vsel %vm1385, %v1306, 0
            %v1425 = vsel %vm1385, %v1311, 0
            %v1428 = vsel %vm1385, %v1316, 0
            %v1431 = vsel %vm1385, %v1321, 0
            %v1434 = vsel %vm1385, %v1326, 0
            %v1437 = vsel %vm1385, %v1331, 0
            %v1440 = vsel %vm1385, %v1336, 0
            %v1443 = vsel %vm1385, %v1341, 0
            %v1446 = vsel %vm1385, %v1346, 0
            %v1449 = vsel %vm1385, %v1351, 0
            %v1452 = vsel %vm1385, %v1356, 0
            %v1455 = vsel %vm1385, %v1361, 0
            %v1458 = vsel %vm1385, %v1366, 0
            %v1461 = vsel %vm1385, %v1371, 0
            %v1464 = vsel %vm1385, %v1376, 0
            %v1467 = vsel %vm1385, %v1381, 0
            %1469 = vmatprep.subr.mxu0 0.0
            %1470 = vmatpush1.msra.mxu0 %v1406
            %1471 = vmatprep.subr.mxu0 0.0
            %1472 = vmatpush1.msra.mxu0 %v1407
            %1473 = vmatprep.subr.mxu0 0.0
            %1474 = vmatpush1.msra.mxu0 %v1408
            %1475 = vmatprep.subr.mxu0 0.0
            %1476 = vmatpush1.msra.mxu0 %v1409
            %1477 = vmatprep.subr.mxu0 0.0
            %1478 = vmatpush1.msra.mxu0 %v1410
            %1479 = vmatprep.subr.mxu0 0.0
            %1480 = vmatpush1.msra.mxu0 %v1411
            %1481 = vmatprep.subr.mxu0 0.0
            %1482 = vmatpush1.msra.mxu0 %v1412
            %1483 = vmatprep.subr.mxu0 0.0
            %1484 = vmatpush1.msra.mxu0 %v1413
            %1485 = vmatprep.subr.mxu0 0.0
            %1486 = vmatpush1.msra.mxu0 0.0
            %1487 = vmatprep.subr.mxu0 0.0
            %1488 = vmatpush1.msra.mxu0 0.0
            %1489 = vmatprep.subr.mxu0 0.0
            %1490 = vmatpush1.msra.mxu0 0.0
            %1491 = vmatprep.subr.mxu0 0.0
            %1492 = vmatpush1.msra.mxu0 0.0
            %1493 = vmatprep.subr.mxu0 0.0
            %1494 = vmatpush1.msra.mxu0 0.0
            %1495 = vmatprep.subr.mxu0 0.0
            %1496 = vmatpush1.msra.mxu0 0.0
            %1497 = vmatprep.subr.mxu0 0.0
            %1498 = vmatpush1.msra.mxu0 0.0
            %1499 = vmatprep.subr.mxu0 0.0
            %1500 = vmatpush1.msra.mxu0 0.0
            %1501 = vmatprep.subr.mxu0 0.0
            %1502 = vmatpush1.msra.mxu0 0.0
            %1503 = vmatprep.subr.mxu0 0.0
            %1504 = vmatpush1.msra.mxu0 0.0
            %1505 = vmatprep.subr.mxu0 0.0
            %1506 = vmatpush1.msra.mxu0 0.0
            %1507 = vmatprep.subr.mxu0 0.0
            %1508 = vmatpush1.msra.mxu0 0.0
            %1509 = vmatprep.subr.mxu0 0.0
            %1510 = vmatpush1.msra.mxu0 0.0
            %1511 = vmatprep.subr.mxu0 0.0
            %1512 = vmatpush1.msra.mxu0 0.0
            %1513 = vmatprep.subr.mxu0 0.0
            %1514 = vmatpush1.msra.mxu0 0.0
            %1515 = vmatprep.subr.mxu0 0.0
            %1516 = vmatpush1.msra.mxu0 0.0
            %1517 = vmatprep.subr.mxu0 0.0
            %1518 = vmatpush1.msra.mxu0 0.0
            %1519 = vmatprep.subr.mxu0 0.0
            %1520 = vmatpush1.msra.mxu0 0.0
            %1521 = vmatprep.subr.mxu0 0.0
            %1522 = vmatpush1.msra.mxu0 0.0
            %1523 = vmatprep.subr.mxu0 0.0
            %1524 = vmatpush1.msra.mxu0 0.0
            %1525 = vmatprep.subr.mxu0 0.0
            %1526 = vmatpush1.msra.mxu0 0.0
            %1527 = vmatprep.subr.mxu0 0.0
            %1528 = vmatpush1.msra.mxu0 0.0
            %1529 = vmatprep.subr.mxu0 0.0
            %1530 = vmatpush1.msra.mxu0 0.0
            %1531 = vmatprep.subr.mxu0 0.0
            %1532 = vmatpush1.msra.mxu0 0.0
            %1533 = vmatprep.mubr.f32.mxu0 0.0
            %1534 = vmatmul.mubr.f32.gmra.mrb[0].mxu0 %v1422
            %v1535 = vpop.f32.mrb[0].mxu0
            %v1536 = vadd.f32 %v1419, %v1535
            %v1537 = vpop.f32.mrb[0].mxu0
            %1538 = vmatprep.mubr.f32.mxu0 0.0
            %1539 = vmatmul.mubr.f32.gmra.mrb[0].mxu0 %v1425
            %v1540 = vpop.f32.mrb[0].mxu0
            %v1541 = vadd.f32 %v1419, %v1540
            %v1542 = vpop.f32.mrb[0].mxu0
            %1543 = vmatprep.mubr.f32.mxu0 0.0
            %1544 = vmatmul.mubr.f32.gmra.mrb[0].mxu0 %v1428
            %v1545 = vpop.f32.mrb[0].mxu0
            %v1546 = vadd.f32 %v1419, %v1545
            %v1547 = vpop.f32.mrb[0].mxu0
            %1548 = vmatprep.mubr.f32.mxu0 0.0
            %1549 = vmatmul.mubr.f32.gmra.mrb[0].mxu0 %v1431
            %v1550 = vpop.f32.mrb[0].mxu0
            %v1551 = vadd.f32 %v1419, %v1550
            %v1552 = vpop.f32.mrb[0].mxu0
            %1553 = vmatprep.mubr.f32.mxu0 0.0
            %1554 = vmatmul.mubr.f32.gmra.mrb[0].mxu0 %v1434
            %v1555 = vpop.f32.mrb[0].mxu0
            %v1556 = vadd.f32 %v1419, %v1555
            %v1557 = vpop.f32.mrb[0].mxu0
            %1558 = vmatprep.mubr.f32.mxu0 0.0
            %1559 = vmatmul.mubr.f32.gmra.mrb[0].mxu0 %v1437
            %v1560 = vpop.f32.mrb[0].mxu0
            %v1561 = vadd.f32 %v1419, %v1560
            %v1562 = vpop.f32.mrb[0].mxu0
            %1563 = vmatprep.mubr.f32.mxu0 0.0
            %1564 = vmatmul.mubr.f32.gmra.mrb[0].mxu0 %v1440
            %v1565 = vpop.f32.mrb[0].mxu0
            %v1566 = vadd.f32 %v1419, %v1565
            %v1567 = vpop.f32.mrb[0].mxu0
            %1568 = vmatprep.mubr.f32.mxu0 0.0
            %1569 = vmatmul.mubr.f32.gmra.mrb[0].mxu0 %v1443
            %v1570 = vpop.f32.mrb[0].mxu0
            %v1571 = vadd.f32 %v1419, %v1570
            %v1572 = vpop.f32.mrb[0].mxu0
            %1573 = vmatprep.mubr.f32.mxu0 0.0
            %1574 = vmatmul.mubr.f32.gmra.mrb[0].mxu0 %v1446
            %v1575 = vpop.f32.mrb[0].mxu0
            %v1576 = vadd.f32 %v1419, %v1575
            %v1577 = vpop.f32.mrb[0].mxu0
            %1578 = vmatprep.mubr.f32.mxu0 0.0
            %1579 = vmatmul.mubr.f32.gmra.mrb[0].mxu0 %v1449
            %v1580 = vpop.f32.mrb[0].mxu0
            %v1581 = vadd.f32 %v1419, %v1580
            %v1582 = vpop.f32.mrb[0].mxu0
            %1583 = vmatprep.mubr.f32.mxu0 0.0
            %1584 = vmatmul.mubr.f32.gmra.mrb[0].mxu0 %v1452
            %v1585 = vpop.f32.mrb[0].mxu0
            %v1586 = vadd.f32 %v1419, %v1585
            %v1587 = vpop.f32.mrb[0].mxu0
            %1588 = vmatprep.mubr.f32.mxu0 0.0
            %1589 = vmatmul.mubr.f32.gmra.mrb[0].mxu0 %v1455
            %v1590 = vpop.f32.mrb[0].mxu0
            %v1591 = vadd.f32 %v1419, %v1590
            %v1592 = vpop.f32.mrb[0].mxu0
            %1593 = vmatprep.mubr.f32.mxu0 0.0
            %1594 = vmatmul.mubr.f32.gmra.mrb[0].mxu0 %v1458
            %v1595 = vpop.f32.mrb[0].mxu0
            %v1596 = vadd.f32 %v1419, %v1595
            %v1597 = vpop.f32.mrb[0].mxu0
            %1598 = vmatprep.mubr.f32.mxu0 0.0
            %1599 = vmatmul.mubr.f32.gmra.mrb[0].mxu0 %v1461
            %v1600 = vpop.f32.mrb[0].mxu0
            %v1601 = vadd.f32 %v1419, %v1600
            %v1602 = vpop.f32.mrb[0].mxu0
            %1603 = vmatprep.mubr.f32.mxu0 0.0
            %1604 = vmatmul.mubr.f32.gmra.mrb[0].mxu0 %v1464
            %v1605 = vpop.f32.mrb[0].mxu0
            %v1606 = vadd.f32 %v1419, %v1605
            %v1607 = vpop.f32.mrb[0].mxu0
            %1608 = vmatprep.mubr.f32.mxu0 0.0
            %1609 = vmatmul.mubr.f32.gmra.mrb[0].mxu0 %v1467
            %v1610 = vpop.f32.mrb[0].mxu0
            %v1611 = vadd.f32 %v1419, %v1610
            %v1612 = vpop.f32.mrb[0].mxu0
            %1613 = vdwg.mxu0
            %1614 = vst [vmem:[%s314] sm:$0xff] %v1536
            %1615 = vst [vmem:[%s314 + $0x8] sm:$0xff] %v1541
            %1616 = vst [vmem:[%s314 + $0x10] sm:$0xff] %v1546
            %1617 = vst [vmem:[%s314 + $0x18] sm:$0xff] %v1551
            %1618 = vst [vmem:[%s314 + $0x20] sm:$0xff] %v1556
            %1619 = vst [vmem:[%s314 + $0x28] sm:$0xff] %v1561
            %1620 = vst [vmem:[%s314 + $0x30] sm:$0xff] %v1566
            %1621 = vst [vmem:[%s314 + $0x38] sm:$0xff] %v1571
            %1622 = vst [vmem:[%s314 + $0x40] sm:$0xff] %v1576
            %1623 = vst [vmem:[%s314 + $0x48] sm:$0xff] %v1581
            %1624 = vst [vmem:[%s314 + $0x50] sm:$0xff] %v1586
            %1625 = vst [vmem:[%s314 + $0x58] sm:$0xff] %v1591
            %1626 = vst [vmem:[%s314 + $0x60] sm:$0xff] %v1596
            %1627 = vst [vmem:[%s314 + $0x68] sm:$0xff] %v1601
            %1628 = vst [vmem:[%s314 + $0x70] sm:$0xff] %v1606
            %1629 = vst [vmem:[%s314 + $0x78] sm:$0xff] %v1611
          $region68: #{tpu_custom_call.1} parent=63 // pred_fallthru
            _
        $region64: #{tpu_custom_call.1} parent=43 // pred_fallthru
          _
        %s1630 = sand.u32 %s189, 1
        %s1631 = scalar_lea.sflag [#allocation7], %s1630
        %s1632 = sand.u32 %s189, 1
        %s1633 = smul.addr %s1632, 128
        %s1634 = scalar_lea.vmem [#allocation8], %s1633
        // Predicated region
        $region69: #{tpu_custom_call.1} parent=43 // pred_check
          %p1635 = pneg %p199
        $region70: #{tpu_custom_call.1} parent=43 // pred_check_branch
          %1637 = sbr.rel (%p1635) target = $region72
        $region71: #{tpu_custom_call.1} parent=43 // pred_region
          %p1638 = scmp.eq.s32.totalorder %s25, 10
          %s1639 = scalar_select %p1638, %s26, 0
          %s1640 = smul.u32 16, %s1639
          %s1642 = ssub.s32 2048, 2048
          %1643 = vsyncadd %s1631, %s1642
          %s1644 = smul.addr %s1640, 128
          %s1645 = scalar_lea.hbm %s6, %s1644
          %s1646 = sshll.u32 %s1634, 4
          %s1647 = int_to_ptr.vmem [resolvable:$true] %s1646
          %1652 = dma.vmem_to_hbm [thread:$0]  %s1647, 2048, %s1645, %s1631, 128, 128, 8
        $region72: #{tpu_custom_call.1} parent=43 // pred_fallthru
          _
      $region44: #{tpu_custom_call.1} parent=5 // pred_fallthru
        _
      %p1653 = scmp.le.s32.totalorder 2, %s16
      // Predicated region
      $region73: #{tpu_custom_call.1} parent=5 // pred_check
        %p1654 = pneg %p1653
      $region74: #{tpu_custom_call.1} parent=5 // pred_check_branch
        %1656 = sbr.rel (%p1654) target = $region76
      $region75: #{tpu_custom_call.1} parent=5 // pred_region
        %s1657 = ssub.s32 %s16, 2
        // Predicated region
        $region77: #{tpu_custom_call.1} parent=75 // pred_check
          %p1658 = pneg %p205
        $region78: #{tpu_custom_call.1} parent=75 // pred_check_branch
          %1660 = sbr.rel (%p1658) target = $region80
        $region79: #{tpu_custom_call.1} parent=75 // pred_region
          %s1661 = sand.u32 %s190, 1
          %s1662 = scalar_lea.sflag [#allocation7], %s1661
          %s1663 = sand.u32 %s190, 1
          %s1664 = smul.addr %s1663, 128
          %s1665 = scalar_lea.vmem [#allocation8], %s1664
          %1666 = dma.done %s1662, 2048
        $region80: #{tpu_custom_call.1} parent=75 // pred_fallthru
          _
      $region76: #{tpu_custom_call.1} parent=5 // pred_fallthru
        _
    $region6: #{tpu_custom_call.1} parent=1 // loop_footer
      %s20 = sadd.s32 1, %s16
    $region7: #{tpu_custom_call.1} parent=1 // loop_footer_branch
      %15 = sbr.rel target = $region3
    $region8: #{tpu_custom_call.1} parent=1 // loop_exit
      _
    %1667 = vsyncpa [#allocation6], 1
    %s1668 = scalar_lea.sflag [#allocation6], 1
    %1669 = vsyncpa %s1668, 1
    %1670 = vsyncpa [#allocation7], 1
    %s1671 = scalar_lea.sflag [#allocation7], 1
    %1672 = vsyncpa %s1671, 1

</llo_original>
